<compile_context>
chip_gen: v7x
topology: tpu7x:2x2x1
jax: 0.10.0
libtpu: 0.0.40
codegen_flags: <defaults>
</compile_context>

<pallas_src>
import math

import numpy as np
import jax
import jax.numpy as jnp
from jax.experimental import pallas as pl
from jax.experimental.pallas import tpu as pltpu

TWOPI = 2.0 * math.pi


def _ewald_kernel(r_ref, qT_ref, kT_ref, w_ref, out_ref):
    # r_ref : (1, N, 8)   fractional positions (cols 0..2 used, rest zero)
    # qT_ref: (1, C, N)   features/charges, channels x atoms (zero-padded atoms)
    # kT_ref: (8, TK)     2*pi * k-vectors (rows 0..2 used, rest zero)
    # w_ref : (1, 1, TK)  per-config weights factor * kfac / V (0 on masked/padded k)
    # out_ref:(1, C, 1)   resident accumulator across the K grid axis
    kk = pl.program_id(1)

    @pl.when(kk == 0)
    def _init():
        out_ref[...] = jnp.zeros_like(out_ref)

    r8 = r_ref[0]                     # (N, 8)
    qT = qT_ref[0]                    # (C, N)
    kT = kT_ref[...]                  # (8, TK)
    w = w_ref[0]                      # (1, TK)

    # phase[n, k] = 2*pi * (k . r_n) -- on the MXU (2*pi folded into kT on the host).
    phase = jnp.dot(r8, kT, precision=jax.lax.Precision.HIGHEST,
                    preferred_element_type=jnp.float32)               # (N, TK)
    cph = jnp.cos(phase)
    sph = jnp.sin(phase)

    # structure factors: S = q^T * exp(i*phase) (real & imaginary parts), on the MXU.
    sr = jnp.dot(qT, cph, preferred_element_type=jnp.float32)         # (C, TK)
    si = jnp.dot(qT, sph, preferred_element_type=jnp.float32)         # (C, TK)

    # weighted reduction over this k-tile, accumulated into the resident output block.
    out_ref[0] += jnp.sum(w * (sr * sr + si * si), axis=-1, keepdims=True)   # (C, 1)


def _choose_k_tile(n_pad, k_count, vmem_budget_bytes=24 << 20):
    """Pick a K tile so phase/cos/sin (3 x f32 x N_pad x TK) stay within the budget."""
    per_col = 3 * n_pad * 4
    tk = max(128, (vmem_budget_bytes // per_col) // 128 * 128)
    tk = min(tk, 8192)
    k_pad128 = ((max(int(k_count), 1) + 127) // 128) * 128
    return int(min(tk, k_pad128))


def ewald_pallas_call(r8, qT, kTw, w, *, tk):
    B, N, _ = r8.shape
    C = qT.shape[1]
    K_pad = kTw.shape[1]
    assert K_pad % tk == 0
    nkt = K_pad // tk
    out = pl.pallas_call(
        _ewald_kernel,
        out_shape=jax.ShapeDtypeStruct((B, C, 1), jnp.float32),
        grid=(B, nkt),
        in_specs=[
            pl.BlockSpec((1, N, 8), lambda b, k: (b, 0, 0)),
            pl.BlockSpec((1, C, N), lambda b, k: (b, 0, 0)),
            pl.BlockSpec((8, tk), lambda b, k: (0, k)),
            pl.BlockSpec((1, 1, tk), lambda b, k: (b, 0, k)),
        ],
        out_specs=pl.BlockSpec((1, C, 1), lambda b, k: (b, 0, 0)),
        compiler_params=pltpu.CompilerParams(
            dimension_semantics=("parallel", "arbitrary"),
            vmem_limit_bytes=48 * 1024 * 1024,
        ),
    )(r8, qT, kTw, w)
    return out[:, :, 0]                                                # (B, C)


def ewald_potential_pallas(positions, q, cell, batch, dl=2.0, sigma=1.0,
                           remove_self_interaction=False, aggregation_mode='sum'):
    """Glue replicating EwaldPotential.forward; hot path runs in the Pallas kernel."""
    positions = np.asarray(positions, np.float64)
    q = np.asarray(q, np.float32)
    if q.ndim == 1:
        q = q[:, None]
    cell = np.asarray(cell, np.float64).reshape(-1, 3, 3)
    box_all = np.stack([np.diag(cell[i]) for i in range(cell.shape[0])])   # (B, 3) f64
    batch = np.asarray(batch)
    uniq = np.unique(batch)
    B = len(uniq)
    C = q.shape[1]

    # Union k-grid over configs (sized by the max nk), compacted to the k's surviving
    # at least one config's spherical cutoff; per-config w masking keeps the rest inert.
    nk_all = np.array([[max(1, int(box_all[bi, d] / dl)) for d in range(3)]
                       for bi in range(B)])
    nk_max = nk_all.max(axis=0)
    kx = np.arange(0, nk_max[0] + 1)
    ky = np.arange(-nk_max[1], nk_max[1] + 1)
    kz = np.arange(-nk_max[2], nk_max[2] + 1)
    KX, KY, KZ = np.meshgrid(kx, ky, kz, indexing='ij')
    kvec = np.stack([KX.ravel(), KY.ravel(), KZ.ravel()], axis=1).astype(np.float64)  # (Kfull, 3)

    ksqmax = (TWOPI / dl) ** 2
    ksq = (TWOPI ** 2) * ((kvec[None, :, 0] / box_all[:, 0:1]) ** 2
                          + (kvec[None, :, 1] / box_all[:, 1:2]) ** 2
                          + (kvec[None, :, 2] / box_all[:, 2:3]) ** 2)     # (B, Kfull)
    mask = (ksq <= ksqmax) & (ksq > 0)
    keep = mask.any(axis=0)
    if not keep.any():
        keep[0] = True                       # degenerate: nothing inside cutoff -> pot = 0
    kvec_c = kvec[keep]                      # (Kc, 3)
    ksq_c = ksq[:, keep]
    mask_c = mask[:, keep]
    Kc = kvec_c.shape[0]

    n_max = max(int(np.sum(batch == ub)) for ub in uniq)
    N_pad = max(8, ((n_max + 7) // 8) * 8)

    TK = _choose_k_tile(N_pad, Kc)
    K_pad = ((Kc + TK - 1) // TK) * TK

    # per-config weights: factor(kx) * exp(-sigma^2/2 * k^2) / k^2 / V
    safe = np.where(ksq_c > 0, ksq_c, 1.0)
    kfac = np.where(mask_c, np.exp(-(sigma ** 2 / 2.0) * safe) / safe, 0.0)   # (B, Kc)
    factor = np.where(kvec_c[:, 0] == 0.0, 1.0, 2.0)[None, :]
    vol = (box_all[:, 0] * box_all[:, 1] * box_all[:, 2])[:, None]
    w_b = np.zeros((B, 1, K_pad), np.float32)
    w_b[:, 0, :Kc] = (kfac * factor / vol).astype(np.float32)

    kTw = np.zeros((8, K_pad), np.float32)
    kTw[:3, :Kc] = (TWOPI * kvec_c.T).astype(np.float32)

    r_b = np.zeros((B, N_pad, 8), np.float32)
    qT_b = np.zeros((B, C, N_pad), np.float32)
    self_e = np.zeros((B,), np.float32)
    for bi, ub in enumerate(uniq):
        m = batch == ub
        nb = int(np.sum(m))
        r_b[bi, :nb, :3] = (positions[m] / box_all[bi]).astype(np.float32)
        qT_b[bi, :, :nb] = q[m].T
        self_e[bi] = np.sum(q[m].astype(np.float64) ** 2) / (sigma * TWOPI ** 1.5)

    pot = ewald_pallas_call(jnp.asarray(r_b), jnp.asarray(qT_b),
                            jnp.asarray(kTw), jnp.asarray(w_b), tk=TK)      # (B, C)
    if remove_self_interaction:
        pot = pot - jnp.asarray(self_e)[:, None]
    # norm_factor = 1.0
    if aggregation_mode == 'sum':
        return jnp.sum(pot, axis=1)          # (B,)
    return pot


def ewald_reference_numpy(positions, q, cell, batch, dl=2.0, sigma=1.0,
                          remove_self_interaction=False, aggregation_mode='sum'):
    """Pure NumPy (float64) reference mirroring compute_potential_optimized."""
    positions = np.asarray(positions, np.float64)
    q = np.asarray(q, np.float64)
    if q.ndim == 1:
        q = q[:, None]
    cell = np.asarray(cell, np.float64).reshape(-1, 3, 3)
    box_all = np.stack([np.diag(cell[i]) for i in range(cell.shape[0])])
    uniq = np.unique(batch)
    ksqmax = (TWOPI / dl) ** 2
    results = []
    for bi, ub in enumerate(uniq):
        m = np.asarray(batch) == ub
        box = box_all[bi]
        r = positions[m] / box
        qb = q[m]
        nk = [max(1, int(box[d] / dl)) for d in range(3)]
        kx = np.arange(0, nk[0] + 1)
        ky = np.arange(-nk[1], nk[1] + 1)
        kz = np.arange(-nk[2], nk[2] + 1)
        KX, KY, KZ = np.meshgrid(kx, ky, kz, indexing='ij')
        kvec = np.stack([KX.ravel(), KY.ravel(), KZ.ravel()], 1).astype(np.float64)
        ksq = (TWOPI ** 2) * ((kvec[:, 0] / box[0]) ** 2 + (kvec[:, 1] / box[1]) ** 2
                              + (kvec[:, 2] / box[2]) ** 2)
        mask = (ksq <= ksqmax) & (ksq > 0)
        kfac = np.zeros_like(ksq)
        kfac[mask] = np.exp(-(sigma ** 2 / 2.0) * ksq[mask]) / ksq[mask]
        factor = np.where(kvec[:, 0] == 0, 1.0, 2.0)
        phase = TWOPI * (r @ kvec.T)
        E = np.exp(1j * phase)
        S = qb.T @ E                              # (C, K)
        pot = (kfac * factor * (S.real ** 2 + S.imag ** 2)).sum(axis=-1)
        pot = pot / (box[0] * box[1] * box[2])
        if remove_self_interaction:
            pot = pot - np.sum(qb ** 2) / (sigma * TWOPI ** 1.5)
        results.append(pot)
    res = np.stack(results, 0)
    return res.sum(axis=1) if aggregation_mode == 'sum' else res


if __name__ == "__main__":
    key = jax.random.PRNGKey(0)
    B, C = 2, 4
    n_per = [12, 16]
    boxes = np.array([[6.2, 7.9, 7.3], [9.1, 5.3, 6.4]], np.float32)
    n_total = sum(n_per)

    k1, k2 = jax.random.split(key)
    frac = np.asarray(jax.random.uniform(k1, (n_total, 3), dtype=jnp.float32))
    batch = np.concatenate([np.full(n_per[i], i, dtype=np.int64) for i in range(B)])
    positions = frac * boxes[batch]
    q = np.asarray(jax.random.normal(k2, (n_total, C), dtype=jnp.float32))
    cell = np.zeros((B, 3, 3), np.float32)
    for i in range(B):
        cell[i] = np.diag(boxes[i])

    out = ewald_potential_pallas(positions, q, cell, batch)
    out = jax.block_until_ready(out)

    ref = ewald_reference_numpy(positions, q, cell, batch)
    assert out.shape == (B,)
    np.testing.assert_allclose(np.asarray(out, np.float64), ref, rtol=2e-3, atol=1e-4)
    print("KERNEL_OK")
</pallas_src>

<mosaic_0001>
module attributes {stable_mosaic.version = 11 : i64} {
  func.func @_ewald_kernel(%arg0: i32, %arg1: i32, %arg2: memref<1x16x8xf32, #tpu.memory_space<vmem>>, %arg3: memref<1x4x16xf32, #tpu.memory_space<vmem>>, %arg4: memref<8x256xf32, #tpu.memory_space<vmem>>, %arg5: memref<1x1x256xf32, #tpu.memory_space<vmem>>, %arg6: memref<1x4x1xf32, #tpu.memory_space<vmem>>) attributes {dimension_semantics = [#tpu.dimension_semantics<parallel>, #tpu.dimension_semantics<arbitrary>], iteration_bounds = array<i64: 2, 1>, scalar_prefetch = 0 : i64, scratch_operands = 0 : i64, tpu.core_type = #tpu.core_type<tc>, window_params = [{transform_indices = @transform_0, window_bounds = array<i64: 1, 16, 8>}, {transform_indices = @transform_1, window_bounds = array<i64: 1, 4, 16>}, {transform_indices = @transform_2, window_bounds = array<i64: 8, 256>}, {transform_indices = @transform_3, window_bounds = array<i64: 1, 1, 256>}, {transform_indices = @transform_4, window_bounds = array<i64: 1, 4, 1>}]} {
    %c0_i32 = arith.constant 0 : i32
    %0 = arith.cmpi eq, %arg1, %c0_i32 : i32
    %1 = arith.extui %0 : i1 to i32
    %c0_i32_0 = arith.constant 0 : i32
    %2 = arith.cmpi ne, %1, %c0_i32_0 : i32
    scf.if %2 {
      %cst_20 = arith.constant 0.000000e+00 : f32
      %28 = vector.broadcast %cst_20 : f32 to vector<1x4x1xf32>
      %c0_21 = arith.constant 0 : index
      %c0_22 = arith.constant 0 : index
      %c0_23 = arith.constant 0 : index
      %29 = vector.load %arg6[%c0_21, %c0_22, %c0_23] : memref<1x4x1xf32, #tpu.memory_space<vmem>>, vector<1x4x1xf32>
      tpu.vector_store %arg6[%c0_21, %c0_22, %c0_23], %28 {strides = array<i32>} : memref<1x4x1xf32, #tpu.memory_space<vmem>>, vector<1x4x1xf32>,
    } else {
    }
    %c0 = arith.constant 0 : index
    %c0_1 = arith.constant 0 : index
    %c0_2 = arith.constant 0 : index
    %3 = vector.load %arg2[%c0, %c0_1, %c0_2] : memref<1x16x8xf32, #tpu.memory_space<vmem>>, vector<1x16x8xf32>
    %4 = vector.shape_cast %3 : vector<1x16x8xf32> to vector<16x8xf32>
    %c0_3 = arith.constant 0 : index
    %c0_4 = arith.constant 0 : index
    %c0_5 = arith.constant 0 : index
    %5 = vector.load %arg3[%c0_3, %c0_4, %c0_5] : memref<1x4x16xf32, #tpu.memory_space<vmem>>, vector<1x4x16xf32>
    %6 = vector.shape_cast %5 : vector<1x4x16xf32> to vector<4x16xf32>
    %c0_6 = arith.constant 0 : index
    %c0_7 = arith.constant 0 : index
    %7 = vector.load %arg4[%c0_6, %c0_7] : memref<8x256xf32, #tpu.memory_space<vmem>>, vector<8x256xf32>
    %c0_8 = arith.constant 0 : index
    %c0_9 = arith.constant 0 : index
    %c0_10 = arith.constant 0 : index
    %8 = vector.load %arg5[%c0_8, %c0_9, %c0_10] : memref<1x1x256xf32, #tpu.memory_space<vmem>>, vector<1x1x256xf32>
    %9 = vector.shape_cast %8 : vector<1x1x256xf32> to vector<1x256xf32>
    %cst = arith.constant dense<0.000000e+00> : vector<16x256xf32>
    %10 = tpu.matmul %4, %7, %cst {dimension_numbers = #tpu.dot_dimension_numbers<[1], [0], [0], [1], [0, 0, 1, 1], [], []>, precision = #tpu.contract_precision<fp32>} : vector<16x8xf32>, vector<8x256xf32>, vector<16x256xf32> -> vector<16x256xf32>
    %11 = math.cos %10 : vector<16x256xf32>
    %12 = math.sin %10 : vector<16x256xf32>
    %cst_11 = arith.constant dense<0.000000e+00> : vector<4x256xf32>
    %13 = tpu.matmul %6, %11, %cst_11 {dimension_numbers = #tpu.dot_dimension_numbers<[1], [0], [0], [1], [0, 0, 1, 1], [], []>} : vector<4x16xf32>, vector<16x256xf32>, vector<4x256xf32> -> vector<4x256xf32>
    %cst_12 = arith.constant dense<0.000000e+00> : vector<4x256xf32>
    %14 = tpu.matmul %6, %12, %cst_12 {dimension_numbers = #tpu.dot_dimension_numbers<[1], [0], [0], [1], [0, 0, 1, 1], [], []>} : vector<4x16xf32>, vector<16x256xf32>, vector<4x256xf32> -> vector<4x256xf32>
    %c0_13 = arith.constant 0 : index
    %c0_14 = arith.constant 0 : index
    %c0_15 = arith.constant 0 : index
    %15 = vector.load %arg6[%c0_13, %c0_14, %c0_15] : memref<1x4x1xf32, #tpu.memory_space<vmem>>, vector<1x4x1xf32>
    %16 = vector.shape_cast %15 : vector<1x4x1xf32> to vector<4x1xf32>
    %17 = arith.mulf %13, %13 : vector<4x256xf32>
    %18 = arith.mulf %14, %14 : vector<4x256xf32>
    %19 = arith.addf %17, %18 : vector<4x256xf32>
    %20 = vector.broadcast %9 : vector<1x256xf32> to vector<4x256xf32>
    %21 = arith.mulf %20, %19 : vector<4x256xf32>
    %cst_16 = arith.constant dense<0.000000e+00> : vector<4xf32>
    %22 = vector.multi_reduction <add>, %21, %cst_16 [1] : vector<4x256xf32> to vector<4xf32>
    %23 = vector.shape_cast %22 : vector<4xf32> to vector<4x1xf32>
    %24 = arith.addf %16, %23 : vector<4x1xf32>
    %c0_17 = arith.constant 0 : index
    %c0_18 = arith.constant 0 : index
    %c0_19 = arith.constant 0 : index
    %25 = vector.load %arg6[%c0_17, %c0_18, %c0_19] : memref<1x4x1xf32, #tpu.memory_space<vmem>>, vector<1x4x1xf32>
    %26 = vector.shape_cast %25 : vector<1x4x1xf32> to vector<4x1xf32>
    %27 = vector.shape_cast %24 : vector<4x1xf32> to vector<1x4x1xf32>
    tpu.vector_store %arg6[%c0_17, %c0_18, %c0_19], %27 {strides = array<i32>} : memref<1x4x1xf32, #tpu.memory_space<vmem>>, vector<1x4x1xf32>,
    return
  }
  func.func @transform_0(%arg0: i32, %arg1: i32) -> (i32, i32, i32) {
    %c0_i32 = arith.constant 0 : i32
    %c0_i32_0 = arith.constant 0 : i32
    %c0_i32_1 = arith.constant 0 : i32
    return %arg0, %c0_i32, %c0_i32_0 : i32, i32, i32
  }
  func.func @transform_1(%arg0: i32, %arg1: i32) -> (i32, i32, i32) {
    %c0_i32 = arith.constant 0 : i32
    %c0_i32_0 = arith.constant 0 : i32
    %c0_i32_1 = arith.constant 0 : i32
    return %arg0, %c0_i32, %c0_i32_0 : i32, i32, i32
  }
  func.func @transform_2(%arg0: i32, %arg1: i32) -> (i32, i32) {
    %c0_i32 = arith.constant 0 : i32
    %c0_i32_0 = arith.constant 0 : i32
    return %c0_i32, %arg1 : i32, i32
  }
  func.func @transform_3(%arg0: i32, %arg1: i32) -> (i32, i32, i32) {
    %c0_i32 = arith.constant 0 : i32
    %c0_i32_0 = arith.constant 0 : i32
    return %arg0, %c0_i32, %arg1 : i32, i32, i32
  }
  func.func @transform_4(%arg0: i32, %arg1: i32) -> (i32, i32, i32) {
    %c0_i32 = arith.constant 0 : i32
    %c0_i32_0 = arith.constant 0 : i32
    %c0_i32_1 = arith.constant 0 : i32
    return %arg0, %c0_i32, %c0_i32_0 : i32, i32, i32
  }
}

</mosaic_0001>

<llo_original>
// kernel: tpu_custom_call.1
$region0: #{tpu_custom_call.1}
  #allocation0 [shape = 'u32[]', space=smem, size = 0x4, offset = 0x4, fixed_abs, tag = 'smem constant byte address 0x4 - core index']
  #allocation1 [shape = 'u32[144,128]{1,0:T(1,128)}', space=vmem, size = 0x12000, scoped, tag = 'internal scratch']
  %s0 = inlined_call_operand.vmem [shape: f32[2,16,8], index: 0, kind: input, shape index: {}]
  %s1 = inlined_call_operand.vmem [shape: f32[2,4,16], index: 1, kind: input, shape index: {}]
  %s2 = inlined_call_operand.vmem [shape: f32[8,256], index: 2, kind: input, shape index: {}]
  %s3 = inlined_call_operand.vmem [shape: f32[2,1,256], index: 3, kind: input, shape index: {}]
  %s4 = inlined_call_operand.vmem [shape: f32[2,4,1], index: 4, kind: output, shape index: {}]
  %s5 = sld [smem:[#allocation0]]
  $region53: #{tpu_custom_call.1} parent=0
    _
  %s7 = ssub.s32 1, %s5
  %s8 = scalar_select 0, %s7, %s5
  loop: start=0, step=1, limit=4
  $region2: #{tpu_custom_call.1} parent=0 // loop_pre_header
    _
  $region3: #{tpu_custom_call.1} parent=0 // loop_header
    %s10 = sphi 0, %s14
    %p11 = scmp.ge.s32.totalorder %s10, 4
    %s17 = sphi 0, %s29
    %s18 = sphi 0, %s25
    %s19 = sphi 0, %s17
    %s20 = sphi 0, %s18
    %s21 = sphi 0, %s19
    %s22 = sphi 0, %s20
    %s32 = sphi 0, %s34
    %s35 = sphi 0, %s32
    %s36 = sphi 0, %s35
    %s52 = sphi 0, %s36
    %s58 = sphi 0, %s60
    %s61 = sphi 0, %s58
    %s62 = sphi 0, %s61
    %s78 = sphi 0, %s62
    %s84 = sphi 0, %s86
    %s87 = sphi 0, %s84
    %s88 = sphi 0, %s87
    %s104 = sphi 0, %s88
    %s112 = sphi 0, %s114
    %s115 = sphi 0, %s112
    %s116 = sphi 0, %s115
    %s132 = sphi 0, %s116
    %s138 = sphi 0, %s140
    %s141 = sphi 0, %s138
    %s142 = sphi 0, %s141
    %s158 = sphi 0, %s142
  $region4: #{tpu_custom_call.1} parent=0 // loop_header_branch
    %13 = sbr.rel (%p11) target = $region8
  $region5: #{tpu_custom_call.1} parent=0 // loop_body
    %s15 = ssub.s32 %s10, 1
    %s16 = ssub.s32 %s10, 2
    %s23 = sadd.s32 1, %s18
    %p24 = scmp.ge.s32.totalorder %s23, 1
    %s25 = scalar_select %p24, 0, %s23
    %s26 = sadd.s32 1, %s17
    %s27 = scalar_select %p24, %s26, %s17
    %p28 = scmp.ge.s32.totalorder %s27, 2
    %s29 = scalar_select %p28, 0, %s27
    %s30 = ssub.s32 %s17, %s29
    %p31 = scmp.eq.s32.totalorder %s30, 0
    %s33 = sadd.s32 %s32, 1
    %s34 = scalar_select %p31, %s32, %s33
    %p37 = pneg %p31
    %p38 = scmp.eq.s32.totalorder %s10, 1
    %p39 = por %p37, %p38
    %p40 = scmp.ne.s32.totalorder %s32, %s35
    %p41 = scmp.eq.s32.totalorder %s10, 0
    %p42 = por %p40, %p41
    %p43 = scmp.ne.s32.totalorder %s32, %s35
    %p44 = scmp.eq.s32.totalorder %s15, 1
    %p45 = por %p43, %p44
    %p46 = scmp.ne.s32.totalorder %s35, %s36
    %p47 = scmp.eq.s32.totalorder %s15, 0
    %p48 = por %p46, %p47
    %p49 = scmp.ne.s32.totalorder %s35, %s36
    %p50 = scmp.eq.s32.totalorder %s16, 1
    %p51 = por %p49, %p50
    %p53 = scmp.ne.s32.totalorder %s36, %s52
    %p54 = scmp.eq.s32.totalorder %s16, 0
    %p55 = por %p53, %p54
    %s56 = ssub.s32 %s17, %s29
    %p57 = scmp.eq.s32.totalorder %s56, 0
    %s59 = sadd.s32 %s58, 1
    %s60 = scalar_select %p57, %s58, %s59
    %p63 = pneg %p57
    %p64 = scmp.eq.s32.totalorder %s10, 1
    %p65 = por %p63, %p64
    %p66 = scmp.ne.s32.totalorder %s58, %s61
    %p67 = scmp.eq.s32.totalorder %s10, 0
    %p68 = por %p66, %p67
    %p69 = scmp.ne.s32.totalorder %s58, %s61
    %p70 = scmp.eq.s32.totalorder %s15, 1
    %p71 = por %p69, %p70
    %p72 = scmp.ne.s32.totalorder %s61, %s62
    %p73 = scmp.eq.s32.totalorder %s15, 0
    %p74 = por %p72, %p73
    %p75 = scmp.ne.s32.totalorder %s61, %s62
    %p76 = scmp.eq.s32.totalorder %s16, 1
    %p77 = por %p75, %p76
    %p79 = scmp.ne.s32.totalorder %s62, %s78
    %p80 = scmp.eq.s32.totalorder %s16, 0
    %p81 = por %p79, %p80
    %s82 = ssub.s32 %s18, %s25
    %p83 = scmp.eq.s32.totalorder %s82, 0
    %s85 = sadd.s32 %s84, 1
    %s86 = scalar_select %p83, %s84, %s85
    %p89 = pneg %p83
    %p90 = scmp.eq.s32.totalorder %s10, 1
    %p91 = por %p89, %p90
    %p92 = scmp.ne.s32.totalorder %s84, %s87
    %p93 = scmp.eq.s32.totalorder %s10, 0
    %p94 = por %p92, %p93
    %p95 = scmp.ne.s32.totalorder %s84, %s87
    %p96 = scmp.eq.s32.totalorder %s15, 1
    %p97 = por %p95, %p96
    %p98 = scmp.ne.s32.totalorder %s87, %s88
    %p99 = scmp.eq.s32.totalorder %s15, 0
    %p100 = por %p98, %p99
    %p101 = scmp.ne.s32.totalorder %s87, %s88
    %p102 = scmp.eq.s32.totalorder %s16, 1
    %p103 = por %p101, %p102
    %p105 = scmp.ne.s32.totalorder %s88, %s104
    %p106 = scmp.eq.s32.totalorder %s16, 0
    %p107 = por %p105, %p106
    %s108 = ssub.s32 %s17, %s29
    %s109 = ssub.s32 %s18, %s25
    %s110 = sor.u32 %s108, %s109
    %p111 = scmp.eq.s32.totalorder %s110, 0
    %s113 = sadd.s32 %s112, 1
    %s114 = scalar_select %p111, %s112, %s113
    %p117 = pneg %p111
    %p118 = scmp.eq.s32.totalorder %s10, 1
    %p119 = por %p117, %p118
    %p120 = scmp.ne.s32.totalorder %s112, %s115
    %p121 = scmp.eq.s32.totalorder %s10, 0
    %p122 = por %p120, %p121
    %p123 = scmp.ne.s32.totalorder %s112, %s115
    %p124 = scmp.eq.s32.totalorder %s15, 1
    %p125 = por %p123, %p124
    %p126 = scmp.ne.s32.totalorder %s115, %s116
    %p127 = scmp.eq.s32.totalorder %s15, 0
    %p128 = por %p126, %p127
    %p129 = scmp.ne.s32.totalorder %s115, %s116
    %p130 = scmp.eq.s32.totalorder %s16, 1
    %p131 = por %p129, %p130
    %p133 = scmp.ne.s32.totalorder %s116, %s132
    %p134 = scmp.eq.s32.totalorder %s16, 0
    %p135 = por %p133, %p134
    %s136 = ssub.s32 %s17, %s29
    %p137 = scmp.eq.s32.totalorder %s136, 0
    %s139 = sadd.s32 %s138, 1
    %s140 = scalar_select %p137, %s138, %s139
    %p143 = pneg %p137
    %p144 = scmp.eq.s32.totalorder %s10, 1
    %p145 = por %p143, %p144
    %p146 = scmp.ne.s32.totalorder %s138, %s141
    %p147 = scmp.eq.s32.totalorder %s10, 0
    %p148 = por %p146, %p147
    %p149 = scmp.ne.s32.totalorder %s138, %s141
    %p150 = scmp.eq.s32.totalorder %s15, 1
    %p151 = por %p149, %p150
    %p152 = scmp.ne.s32.totalorder %s141, %s142
    %p153 = scmp.eq.s32.totalorder %s15, 0
    %p154 = por %p152, %p153
    %p155 = scmp.ne.s32.totalorder %s141, %s142
    %p156 = scmp.eq.s32.totalorder %s16, 1
    %p157 = por %p155, %p156
    %p159 = scmp.ne.s32.totalorder %s142, %s158
    %p160 = scmp.eq.s32.totalorder %s16, 0
    %p161 = por %p159, %p160
    %p162 = scmp.le.s32.totalorder 1, %s10
    %p163 = scmp.lt.s32.totalorder %s10, 3
    %p164 = pnand %p162, %p163
    %p165 = pneg %p164
    // Predicated region
    $region9: #{tpu_custom_call.1} parent=5 // pred_check
      _
    $region10: #{tpu_custom_call.1} parent=5 // pred_check_branch
      %167 = sbr.rel (%p164) target = $region12
    $region11: #{tpu_custom_call.1} parent=5 // pred_region
      %s168 = ssub.s32 %s10, 1
      // Predicated region
      $region13: #{tpu_custom_call.1} parent=11 // pred_check
        %p169 = pneg %p100
      $region14: #{tpu_custom_call.1} parent=11 // pred_check_branch
        %171 = sbr.rel (%p169) target = $region16
      $region15: #{tpu_custom_call.1} parent=11 // pred_region
        %s172 = smul.u32 2, %s20
        %p173 = scmp.lt.s32.totalorder %s172, 1
        %s174 = scalar_select %p173, %s172, 1
        %s175 = smul.addr %s174, 8
        %s176 = scalar_lea.vmem %s2, %s175
        %s177 = smul.u32 2, %s20
      $region16: #{tpu_custom_call.1} parent=11 // pred_fallthru
        _
    $region12: #{tpu_custom_call.1} parent=5 // pred_fallthru
      _
    %p178 = scmp.lt.s32.totalorder %s10, 2
    // Predicated region
    $region17: #{tpu_custom_call.1} parent=5 // pred_check
      %p179 = pneg %p178
    $region18: #{tpu_custom_call.1} parent=5 // pred_check_branch
      %181 = sbr.rel (%p179) target = $region20
    $region19: #{tpu_custom_call.1} parent=5 // pred_region
      // Predicated region
      $region21: #{tpu_custom_call.1} parent=19 // pred_check
        %p182 = pneg %p42
      $region22: #{tpu_custom_call.1} parent=19 // pred_check_branch
        %184 = sbr.rel (%p182) target = $region24
      $region23: #{tpu_custom_call.1} parent=19 // pred_region
        %p185 = scmp.lt.s32.totalorder %s17, 1
        %s186 = scalar_select %p185, %s17, 1
        %s187 = smul.addr %s186, 2
        %s188 = smul.addr %s187, 8
        %s189 = scalar_lea.vmem %s0, %s188
      $region24: #{tpu_custom_call.1} parent=19 // pred_fallthru
        _
      // Predicated region
      $region25: #{tpu_custom_call.1} parent=19 // pred_check
        %p190 = pneg %p68
      $region26: #{tpu_custom_call.1} parent=19 // pred_check_branch
        %192 = sbr.rel (%p190) target = $region28
      $region27: #{tpu_custom_call.1} parent=19 // pred_region
        %p193 = scmp.lt.s32.totalorder %s17, 1
        %s194 = scalar_select %p193, %s17, 1
        %s195 = smul.addr %s194, 4
        %s196 = scalar_lea.vmem %s1, %s195
      $region28: #{tpu_custom_call.1} parent=19 // pred_fallthru
        _
      // Predicated region
      $region29: #{tpu_custom_call.1} parent=19 // pred_check
        %p197 = pneg %p122
      $region30: #{tpu_custom_call.1} parent=19 // pred_check_branch
        %199 = sbr.rel (%p197) target = $region32
      $region31: #{tpu_custom_call.1} parent=19 // pred_region
        %s200 = smul.u32 2, %s18
        %p201 = scmp.lt.s32.totalorder %s17, 1
        %s202 = scalar_select %p201, %s17, 1
        %p203 = scmp.lt.s32.totalorder %s200, 1
        %s204 = scalar_select %p203, %s200, 1
        %s205 = smul.addr %s202, 2
        %s206 = sadd.s32 %s204, %s205
        %s207 = scalar_lea.vmem %s3, %s206
        %s208 = smul.u32 2, %s18
      $region32: #{tpu_custom_call.1} parent=19 // pred_fallthru
        _
    $region20: #{tpu_custom_call.1} parent=5 // pred_fallthru
      _
    %p209 = scmp.le.s32.totalorder 1, %s10
    %p210 = scmp.lt.s32.totalorder %s10, 3
    %p211 = pnand %p209, %p210
    %p212 = pneg %p211
    // Predicated region
    $region33: #{tpu_custom_call.1} parent=5 // pred_check
      _
    $region34: #{tpu_custom_call.1} parent=5 // pred_check_branch
      %214 = sbr.rel (%p211) target = $region36
    $region35: #{tpu_custom_call.1} parent=5 // pred_region
      %s215 = ssub.s32 %s10, 1
      %p216 = scmp.lt.s32.totalorder %s19, 1
      %s217 = scalar_select %p216, %s19, 1
      %s218 = smul.addr %s217, 2
      %s219 = smul.addr %s218, 8
      %s220 = scalar_lea.vmem %s0, %s219
      %p221 = pneg %p48
      %p222 = pneg %p45
      %p223 = scmp.lt.s32.totalorder %s19, 1
      %s224 = scalar_select %p223, %s19, 1
      %s225 = smul.addr %s224, 4
      %s226 = scalar_lea.vmem %s1, %s225
      %p227 = pneg %p74
      %p228 = pneg %p71
      %s229 = smul.u32 2, %s20
      %p230 = scmp.lt.s32.totalorder %s229, 1
      %s231 = scalar_select %p230, %s229, 1
      %s232 = smul.addr %s231, 8
      %s233 = scalar_lea.vmem %s2, %s232
      %p234 = pneg %p100
      %p235 = pneg %p97
      %s236 = smul.u32 2, %s20
      %p237 = scmp.lt.s32.totalorder %s19, 1
      %s238 = scalar_select %p237, %s19, 1
      %p239 = scmp.lt.s32.totalorder %s236, 1
      %s240 = scalar_select %p239, %s236, 1
      %s241 = smul.addr %s238, 2
      %s242 = sadd.s32 %s240, %s241
      %s243 = scalar_lea.vmem %s3, %s242
      %p244 = pneg %p128
      %p245 = pneg %p125
      %p246 = pneg %p154
      %p247 = pneg %p151
      %p248 = scmp.lt.s32.totalorder %s19, 1
      %s249 = scalar_select %p248, %s19, 1
      %s250 = smul.addr %s249, 4
      %s251 = scalar_lea.vmem %s4, %s250
      %p252 = scmp.lt.s32.totalorder %s19, 1
      %s253 = scalar_select %p252, %s19, 1
      %s254 = smul.addr %s253, 2
      %s255 = smul.addr %s254, 8
      %s256 = scalar_lea.vmem %s0, %s255
      %p257 = scmp.lt.s32.totalorder %s19, 1
      %s258 = scalar_select %p257, %s19, 1
      %s259 = smul.addr %s258, 4
      %s260 = scalar_lea.vmem %s1, %s259
      %s261 = smul.u32 2, %s20
      %p262 = scmp.lt.s32.totalorder %s261, 1
      %s263 = scalar_select %p262, %s261, 1
      %s264 = smul.addr %s263, 8
      %s265 = scalar_lea.vmem %s2, %s264
      %s266 = smul.u32 2, %s20
      %s267 = smul.u32 2, %s20
      %p268 = scmp.lt.s32.totalorder %s19, 1
      %s269 = scalar_select %p268, %s19, 1
      %p270 = scmp.lt.s32.totalorder %s267, 1
      %s271 = scalar_select %p270, %s267, 1
      %s272 = smul.addr %s269, 2
      %s273 = sadd.s32 %s271, %s272
      %s274 = scalar_lea.vmem %s3, %s273
      %s275 = smul.u32 2, %s20
      %p276 = scmp.lt.s32.totalorder %s19, 1
      %s277 = scalar_select %p276, %s19, 1
      %s278 = smul.addr %s277, 4
      %s279 = scalar_lea.vmem %s4, %s278
      %p280 = scmp.eq.s32.totalorder %s20, 0
      // Predicated region
      $region37: #{tpu_custom_call.1} parent=35 // pred_check
        %p281 = pneg %p280
      $region38: #{tpu_custom_call.1} parent=35 // pred_check_branch
        %283 = sbr.rel (%p281) target = $region40
      $region39: #{tpu_custom_call.1} parent=35 // pred_region
        %vm284 = vcmask 3072
        %285 = vst.msk [vmem:[%s279] sm:$0xf] %vm284, 0.0
      $region40: #{tpu_custom_call.1} parent=35 // pred_fallthru
        _
      %v286 = vld [vmem:[%s256] sm:$0xff]
      %v287 = vld [vmem:[%s256 + $0x8] sm:$0xff]
      %v288 = vld [vmem:[%s260] sm:$0xf]
      %v289 = vld [vmem:[%s265] sm:$0xff]
      %v290 = vld [vmem:[%s265 + $0x8] sm:$0xff]
      %v291 = vld [vmem:[%s274] sm:$0x3]
      %vm292 = vcmask 64512
      %v294 = vsel %vm292, %v286, 0
      %v297 = vsel %vm292, %v287, 0
      %v299 = vand.u32 %v290, 4294901760
      %300 = vmatprep.subr.mxu0 %v299
      %v301 = vand.u32 %v289, 4294901760
      %302 = vmatpush1.msra.mxu0 %v301
      %303 = vmatprep.subr.mxu0 0.0
      %304 = vmatpush1.msra.mxu0 0.0
      %305 = vmatprep.subr.mxu0 0.0
      %306 = vmatpush1.msra.mxu0 0.0
      %307 = vmatprep.subr.mxu0 0.0
      %308 = vmatpush1.msra.mxu0 0.0
      %309 = vmatprep.subr.mxu0 0.0
      %310 = vmatpush1.msra.mxu0 0.0
      %311 = vmatprep.subr.mxu0 0.0
      %312 = vmatpush1.msra.mxu0 0.0
      %313 = vmatprep.subr.mxu0 0.0
      %314 = vmatpush1.msra.mxu0 0.0
      %315 = vmatprep.subr.mxu0 0.0
      %316 = vmatpush1.msra.mxu0 0.0
      %317 = vmatprep.subr.mxu0 0.0
      %318 = vmatpush1.msra.mxu0 0.0
      %319 = vmatprep.subr.mxu0 0.0
      %320 = vmatpush1.msra.mxu0 0.0
      %321 = vmatprep.subr.mxu0 0.0
      %322 = vmatpush1.msra.mxu0 0.0
      %323 = vmatprep.subr.mxu0 0.0
      %324 = vmatpush1.msra.mxu0 0.0
      %325 = vmatprep.subr.mxu0 0.0
      %326 = vmatpush1.msra.mxu0 0.0
      %327 = vmatprep.subr.mxu0 0.0
      %328 = vmatpush1.msra.mxu0 0.0
      %329 = vmatprep.subr.mxu0 0.0
      %330 = vmatpush1.msra.mxu0 0.0
      %331 = vmatprep.subr.mxu0 0.0
      %332 = vmatpush1.msra.mxu0 0.0
      %333 = vmatprep.subr.mxu0 0.0
      %334 = vmatpush1.msra.mxu0 0.0
      %335 = vmatprep.subr.mxu0 0.0
      %336 = vmatpush1.msra.mxu0 0.0
      %337 = vmatprep.subr.mxu0 0.0
      %338 = vmatpush1.msra.mxu0 0.0
      %339 = vmatprep.subr.mxu0 0.0
      %340 = vmatpush1.msra.mxu0 0.0
      %341 = vmatprep.subr.mxu0 0.0
      %342 = vmatpush1.msra.mxu0 0.0
      %343 = vmatprep.subr.mxu0 0.0
      %344 = vmatpush1.msra.mxu0 0.0
      %345 = vmatprep.subr.mxu0 0.0
      %346 = vmatpush1.msra.mxu0 0.0
      %347 = vmatprep.subr.mxu0 0.0
      %348 = vmatpush1.msra.mxu0 0.0
      %349 = vmatprep.subr.mxu0 0.0
      %350 = vmatpush1.msra.mxu0 0.0
      %351 = vmatprep.subr.mxu0 0.0
      %352 = vmatpush1.msra.mxu0 0.0
      %353 = vmatprep.subr.mxu0 0.0
      %354 = vmatpush1.msra.mxu0 0.0
      %355 = vmatprep.subr.mxu0 0.0
      %356 = vmatpush1.msra.mxu0 0.0
      %357 = vmatprep.subr.mxu0 0.0
      %358 = vmatpush1.msra.mxu0 0.0
      %359 = vmatprep.subr.mxu0 0.0
      %360 = vmatpush1.msra.mxu0 0.0
      %361 = vmatprep.subr.mxu0 0.0
      %362 = vmatpush1.msra.mxu0 0.0
      %363 = vmatprep.subr.mxu0 0.0
      %364 = vmatpush1.msra.mxu0 0.0
      %365 = vmatprep.mubr.f32.mxu0 0.0
      %v366 = vand.u32 %v294, 4294901760
      %v367 = vsub.f32 %v294, %v366
      %v368 = vand.u32 %v367, 4294901760
      %v369 = vsub.f32 %v367, %v368
      %v370 = vand.u32 %v369, 4294901760
      %371 = vmatmul.mubr.f32.gmra.mrb[0].mxu0 %v370
      %v372 = vpop.f32.mrb[0].mxu0
      %v373 = vadd.f32 0.0, %v372
      %v374 = vpop.f32.mrb[0].mxu0
      %v375 = vadd.f32 0.0, %v374
      %376 = vmatprep.mubr.f32.mxu0 0.0
      %v377 = vand.u32 %v297, 4294901760
      %v378 = vsub.f32 %v297, %v377
      %v379 = vand.u32 %v378, 4294901760
      %v380 = vsub.f32 %v378, %v379
      %v381 = vand.u32 %v380, 4294901760
      %382 = vmatmul.mubr.f32.gmra.mrb[0].mxu0 %v381
      %v383 = vpop.f32.mrb[0].mxu0
      %v384 = vadd.f32 0.0, %v383
      %v385 = vpop.f32.mrb[0].mxu0
      %v386 = vadd.f32 0.0, %v385
      %387 = vdwg.mxu0
      %v388 = vand.u32 %v290, 4294901760
      %v389 = vsub.f32 %v290, %v388
      %v390 = vand.u32 %v389, 4294901760
      %v391 = vsub.f32 %v389, %v390
      %v392 = vand.u32 %v391, 4294901760
      %393 = vmatprep.subr.mxu0 %v392
      %v394 = vand.u32 %v289, 4294901760
      %v395 = vsub.f32 %v289, %v394
      %v396 = vand.u32 %v395, 4294901760
      %v397 = vsub.f32 %v395, %v396
      %v398 = vand.u32 %v397, 4294901760
      %399 = vmatpush1.msra.mxu0 %v398
      %400 = vmatprep.subr.mxu0 0.0
      %401 = vmatpush1.msra.mxu0 0.0
      %402 = vmatprep.subr.mxu0 0.0
      %403 = vmatpush1.msra.mxu0 0.0
      %404 = vmatprep.subr.mxu0 0.0
      %405 = vmatpush1.msra.mxu0 0.0
      %406 = vmatprep.subr.mxu0 0.0
      %407 = vmatpush1.msra.mxu0 0.0
      %408 = vmatprep.subr.mxu0 0.0
      %409 = vmatpush1.msra.mxu0 0.0
      %410 = vmatprep.subr.mxu0 0.0
      %411 = vmatpush1.msra.mxu0 0.0
      %412 = vmatprep.subr.mxu0 0.0
      %413 = vmatpush1.msra.mxu0 0.0
      %414 = vmatprep.subr.mxu0 0.0
      %415 = vmatpush1.msra.mxu0 0.0
      %416 = vmatprep.subr.mxu0 0.0
      %417 = vmatpush1.msra.mxu0 0.0
      %418 = vmatprep.subr.mxu0 0.0
      %419 = vmatpush1.msra.mxu0 0.0
      %420 = vmatprep.subr.mxu0 0.0
      %421 = vmatpush1.msra.mxu0 0.0
      %422 = vmatprep.subr.mxu0 0.0
      %423 = vmatpush1.msra.mxu0 0.0
      %424 = vmatprep.subr.mxu0 0.0
      %425 = vmatpush1.msra.mxu0 0.0
      %426 = vmatprep.subr.mxu0 0.0
      %427 = vmatpush1.msra.mxu0 0.0
      %428 = vmatprep.subr.mxu0 0.0
      %429 = vmatpush1.msra.mxu0 0.0
      %430 = vmatprep.subr.mxu0 0.0
      %431 = vmatpush1.msra.mxu0 0.0
      %432 = vmatprep.subr.mxu0 0.0
      %433 = vmatpush1.msra.mxu0 0.0
      %434 = vmatprep.subr.mxu0 0.0
      %435 = vmatpush1.msra.mxu0 0.0
      %436 = vmatprep.subr.mxu0 0.0
      %437 = vmatpush1.msra.mxu0 0.0
      %438 = vmatprep.subr.mxu0 0.0
      %439 = vmatpush1.msra.mxu0 0.0
      %440 = vmatprep.subr.mxu0 0.0
      %441 = vmatpush1.msra.mxu0 0.0
      %442 = vmatprep.subr.mxu0 0.0
      %443 = vmatpush1.msra.mxu0 0.0
      %444 = vmatprep.subr.mxu0 0.0
      %445 = vmatpush1.msra.mxu0 0.0
      %446 = vmatprep.subr.mxu0 0.0
      %447 = vmatpush1.msra.mxu0 0.0
      %448 = vmatprep.subr.mxu0 0.0
      %449 = vmatpush1.msra.mxu0 0.0
      %450 = vmatprep.subr.mxu0 0.0
      %451 = vmatpush1.msra.mxu0 0.0
      %452 = vmatprep.subr.mxu0 0.0
      %453 = vmatpush1.msra.mxu0 0.0
      %454 = vmatprep.subr.mxu0 0.0
      %455 = vmatpush1.msra.mxu0 0.0
      %456 = vmatprep.subr.mxu0 0.0
      %457 = vmatpush1.msra.mxu0 0.0
      %458 = vmatprep.subr.mxu0 0.0
      %459 = vmatpush1.msra.mxu0 0.0
      %460 = vmatprep.subr.mxu0 0.0
      %461 = vmatpush1.msra.mxu0 0.0
      %462 = vmatprep.mubr.f32.mxu0 0.0
      %v463 = vand.u32 %v294, 4294901760
      %464 = vmatmul.mubr.f32.gmra.mrb[0].mxu0 %v463
      %v465 = vpop.f32.mrb[0].mxu0
      %v466 = vadd.f32 %v373, %v465
      %v467 = vpop.f32.mrb[0].mxu0
      %v468 = vadd.f32 %v375, %v467
      %469 = vmatprep.mubr.f32.mxu0 0.0
      %v470 = vand.u32 %v297, 4294901760
      %471 = vmatmul.mubr.f32.gmra.mrb[0].mxu0 %v470
      %v472 = vpop.f32.mrb[0].mxu0
      %v473 = vadd.f32 %v384, %v472
      %v474 = vpop.f32.mrb[0].mxu0
      %v475 = vadd.f32 %v386, %v474
      %476 = vdwg.mxu0
      %v477 = vand.u32 %v290, 4294901760
      %v478 = vsub.f32 %v290, %v477
      %479 = vmatprep.subr.mxu0 %v478
      %v480 = vand.u32 %v289, 4294901760
      %v481 = vsub.f32 %v289, %v480
      %482 = vmatpush1.msra.mxu0 %v481
      %483 = vmatprep.subr.mxu0 0.0
      %484 = vmatpush1.msra.mxu0 0.0
      %485 = vmatprep.subr.mxu0 0.0
      %486 = vmatpush1.msra.mxu0 0.0
      %487 = vmatprep.subr.mxu0 0.0
      %488 = vmatpush1.msra.mxu0 0.0
      %489 = vmatprep.subr.mxu0 0.0
      %490 = vmatpush1.msra.mxu0 0.0
      %491 = vmatprep.subr.mxu0 0.0
      %492 = vmatpush1.msra.mxu0 0.0
      %493 = vmatprep.subr.mxu0 0.0
      %494 = vmatpush1.msra.mxu0 0.0
      %495 = vmatprep.subr.mxu0 0.0
      %496 = vmatpush1.msra.mxu0 0.0
      %497 = vmatprep.subr.mxu0 0.0
      %498 = vmatpush1.msra.mxu0 0.0
      %499 = vmatprep.subr.mxu0 0.0
      %500 = vmatpush1.msra.mxu0 0.0
      %501 = vmatprep.subr.mxu0 0.0
      %502 = vmatpush1.msra.mxu0 0.0
      %503 = vmatprep.subr.mxu0 0.0
      %504 = vmatpush1.msra.mxu0 0.0
      %505 = vmatprep.subr.mxu0 0.0
      %506 = vmatpush1.msra.mxu0 0.0
      %507 = vmatprep.subr.mxu0 0.0
      %508 = vmatpush1.msra.mxu0 0.0
      %509 = vmatprep.subr.mxu0 0.0
      %510 = vmatpush1.msra.mxu0 0.0
      %511 = vmatprep.subr.mxu0 0.0
      %512 = vmatpush1.msra.mxu0 0.0
      %513 = vmatprep.subr.mxu0 0.0
      %514 = vmatpush1.msra.mxu0 0.0
      %515 = vmatprep.subr.mxu0 0.0
      %516 = vmatpush1.msra.mxu0 0.0
      %517 = vmatprep.subr.mxu0 0.0
      %518 = vmatpush1.msra.mxu0 0.0
      %519 = vmatprep.subr.mxu0 0.0
      %520 = vmatpush1.msra.mxu0 0.0
      %521 = vmatprep.subr.mxu0 0.0
      %522 = vmatpush1.msra.mxu0 0.0
      %523 = vmatprep.subr.mxu0 0.0
      %524 = vmatpush1.msra.mxu0 0.0
      %525 = vmatprep.subr.mxu0 0.0
      %526 = vmatpush1.msra.mxu0 0.0
      %527 = vmatprep.subr.mxu0 0.0
      %528 = vmatpush1.msra.mxu0 0.0
      %529 = vmatprep.subr.mxu0 0.0
      %530 = vmatpush1.msra.mxu0 0.0
      %531 = vmatprep.subr.mxu0 0.0
      %532 = vmatpush1.msra.mxu0 0.0
      %533 = vmatprep.subr.mxu0 0.0
      %534 = vmatpush1.msra.mxu0 0.0
      %535 = vmatprep.subr.mxu0 0.0
      %536 = vmatpush1.msra.mxu0 0.0
      %537 = vmatprep.subr.mxu0 0.0
      %538 = vmatpush1.msra.mxu0 0.0
      %539 = vmatprep.subr.mxu0 0.0
      %540 = vmatpush1.msra.mxu0 0.0
      %541 = vmatprep.subr.mxu0 0.0
      %542 = vmatpush1.msra.mxu0 0.0
      %543 = vmatprep.subr.mxu0 0.0
      %544 = vmatpush1.msra.mxu0 0.0
      %545 = vmatprep.mubr.f32.mxu0 0.0
      %v546 = vand.u32 %v294, 4294901760
      %v547 = vsub.f32 %v294, %v546
      %548 = vmatmul.mubr.f32.gmra.mrb[0].mxu0 %v547
      %v549 = vpop.f32.mrb[0].mxu0
      %v550 = vadd.f32 %v466, %v549
      %v551 = vpop.f32.mrb[0].mxu0
      %v552 = vadd.f32 %v468, %v551
      %553 = vmatprep.mubr.f32.mxu0 0.0
      %v554 = vand.u32 %v297, 4294901760
      %v555 = vsub.f32 %v297, %v554
      %556 = vmatmul.mubr.f32.gmra.mrb[0].mxu0 %v555
      %v557 = vpop.f32.mrb[0].mxu0
      %v558 = vadd.f32 %v473, %v557
      %v559 = vpop.f32.mrb[0].mxu0
      %v560 = vadd.f32 %v475, %v559
      %561 = vdwg.mxu0
      %v562 = vand.u32 %v290, 4294901760
      %563 = vmatprep.subr.mxu0 %v562
      %v564 = vand.u32 %v289, 4294901760
      %565 = vmatpush1.msra.mxu0 %v564
      %566 = vmatprep.subr.mxu0 0.0
      %567 = vmatpush1.msra.mxu0 0.0
      %568 = vmatprep.subr.mxu0 0.0
      %569 = vmatpush1.msra.mxu0 0.0
      %570 = vmatprep.subr.mxu0 0.0
      %571 = vmatpush1.msra.mxu0 0.0
      %572 = vmatprep.subr.mxu0 0.0
      %573 = vmatpush1.msra.mxu0 0.0
      %574 = vmatprep.subr.mxu0 0.0
      %575 = vmatpush1.msra.mxu0 0.0
      %576 = vmatprep.subr.mxu0 0.0
      %577 = vmatpush1.msra.mxu0 0.0
      %578 = vmatprep.subr.mxu0 0.0
      %579 = vmatpush1.msra.mxu0 0.0
      %580 = vmatprep.subr.mxu0 0.0
      %581 = vmatpush1.msra.mxu0 0.0
      %582 = vmatprep.subr.mxu0 0.0
      %583 = vmatpush1.msra.mxu0 0.0
      %584 = vmatprep.subr.mxu0 0.0
      %585 = vmatpush1.msra.mxu0 0.0
      %586 = vmatprep.subr.mxu0 0.0
      %587 = vmatpush1.msra.mxu0 0.0
      %588 = vmatprep.subr.mxu0 0.0
      %589 = vmatpush1.msra.mxu0 0.0
      %590 = vmatprep.subr.mxu0 0.0
      %591 = vmatpush1.msra.mxu0 0.0
      %592 = vmatprep.subr.mxu0 0.0
      %593 = vmatpush1.msra.mxu0 0.0
      %594 = vmatprep.subr.mxu0 0.0
      %595 = vmatpush1.msra.mxu0 0.0
      %596 = vmatprep.subr.mxu0 0.0
      %597 = vmatpush1.msra.mxu0 0.0
      %598 = vmatprep.subr.mxu0 0.0
      %599 = vmatpush1.msra.mxu0 0.0
      %600 = vmatprep.subr.mxu0 0.0
      %601 = vmatpush1.msra.mxu0 0.0
      %602 = vmatprep.subr.mxu0 0.0
      %603 = vmatpush1.msra.mxu0 0.0
      %604 = vmatprep.subr.mxu0 0.0
      %605 = vmatpush1.msra.mxu0 0.0
      %606 = vmatprep.subr.mxu0 0.0
      %607 = vmatpush1.msra.mxu0 0.0
      %608 = vmatprep.subr.mxu0 0.0
      %609 = vmatpush1.msra.mxu0 0.0
      %610 = vmatprep.subr.mxu0 0.0
      %611 = vmatpush1.msra.mxu0 0.0
      %612 = vmatprep.subr.mxu0 0.0
      %613 = vmatpush1.msra.mxu0 0.0
      %614 = vmatprep.subr.mxu0 0.0
      %615 = vmatpush1.msra.mxu0 0.0
      %616 = vmatprep.subr.mxu0 0.0
      %617 = vmatpush1.msra.mxu0 0.0
      %618 = vmatprep.subr.mxu0 0.0
      %619 = vmatpush1.msra.mxu0 0.0
      %620 = vmatprep.subr.mxu0 0.0
      %621 = vmatpush1.msra.mxu0 0.0
      %622 = vmatprep.subr.mxu0 0.0
      %623 = vmatpush1.msra.mxu0 0.0
      %624 = vmatprep.subr.mxu0 0.0
      %625 = vmatpush1.msra.mxu0 0.0
      %626 = vmatprep.subr.mxu0 0.0
      %627 = vmatpush1.msra.mxu0 0.0
      %628 = vmatprep.mubr.f32.mxu0 0.0
      %v629 = vand.u32 %v294, 4294901760
      %v630 = vsub.f32 %v294, %v629
      %v631 = vand.u32 %v630, 4294901760
      %632 = vmatmul.mubr.f32.gmra.mrb[0].mxu0 %v631
      %v633 = vpop.f32.mrb[0].mxu0
      %v634 = vadd.f32 %v550, %v633
      %v635 = vpop.f32.mrb[0].mxu0
      %v636 = vadd.f32 %v552, %v635
      %637 = vmatprep.mubr.f32.mxu0 0.0
      %v638 = vand.u32 %v297, 4294901760
      %v639 = vsub.f32 %v297, %v638
      %v640 = vand.u32 %v639, 4294901760
      %641 = vmatmul.mubr.f32.gmra.mrb[0].mxu0 %v640
      %v642 = vpop.f32.mrb[0].mxu0
      %v643 = vadd.f32 %v558, %v642
      %v644 = vpop.f32.mrb[0].mxu0
      %v645 = vadd.f32 %v560, %v644
      %646 = vdwg.mxu0
      %v647 = vand.u32 %v290, 4294901760
      %v648 = vsub.f32 %v290, %v647
      %v649 = vand.u32 %v648, 4294901760
      %650 = vmatprep.subr.mxu0 %v649
      %v651 = vand.u32 %v289, 4294901760
      %v652 = vsub.f32 %v289, %v651
      %v653 = vand.u32 %v652, 4294901760
      %654 = vmatpush1.msra.mxu0 %v653
      %655 = vmatprep.subr.mxu0 0.0
      %656 = vmatpush1.msra.mxu0 0.0
      %657 = vmatprep.subr.mxu0 0.0
      %658 = vmatpush1.msra.mxu0 0.0
      %659 = vmatprep.subr.mxu0 0.0
      %660 = vmatpush1.msra.mxu0 0.0
      %661 = vmatprep.subr.mxu0 0.0
      %662 = vmatpush1.msra.mxu0 0.0
      %663 = vmatprep.subr.mxu0 0.0
      %664 = vmatpush1.msra.mxu0 0.0
      %665 = vmatprep.subr.mxu0 0.0
      %666 = vmatpush1.msra.mxu0 0.0
      %667 = vmatprep.subr.mxu0 0.0
      %668 = vmatpush1.msra.mxu0 0.0
      %669 = vmatprep.subr.mxu0 0.0
      %670 = vmatpush1.msra.mxu0 0.0
      %671 = vmatprep.subr.mxu0 0.0
      %672 = vmatpush1.msra.mxu0 0.0
      %673 = vmatprep.subr.mxu0 0.0
      %674 = vmatpush1.msra.mxu0 0.0
      %675 = vmatprep.subr.mxu0 0.0
      %676 = vmatpush1.msra.mxu0 0.0
      %677 = vmatprep.subr.mxu0 0.0
      %678 = vmatpush1.msra.mxu0 0.0
      %679 = vmatprep.subr.mxu0 0.0
      %680 = vmatpush1.msra.mxu0 0.0
      %681 = vmatprep.subr.mxu0 0.0
      %682 = vmatpush1.msra.mxu0 0.0
      %683 = vmatprep.subr.mxu0 0.0
      %684 = vmatpush1.msra.mxu0 0.0
      %685 = vmatprep.subr.mxu0 0.0
      %686 = vmatpush1.msra.mxu0 0.0
      %687 = vmatprep.subr.mxu0 0.0
      %688 = vmatpush1.msra.mxu0 0.0
      %689 = vmatprep.subr.mxu0 0.0
      %690 = vmatpush1.msra.mxu0 0.0
      %691 = vmatprep.subr.mxu0 0.0
      %692 = vmatpush1.msra.mxu0 0.0
      %693 = vmatprep.subr.mxu0 0.0
      %694 = vmatpush1.msra.mxu0 0.0
      %695 = vmatprep.subr.mxu0 0.0
      %696 = vmatpush1.msra.mxu0 0.0
      %697 = vmatprep.subr.mxu0 0.0
      %698 = vmatpush1.msra.mxu0 0.0
      %699 = vmatprep.subr.mxu0 0.0
      %700 = vmatpush1.msra.mxu0 0.0
      %701 = vmatprep.subr.mxu0 0.0
      %702 = vmatpush1.msra.mxu0 0.0
      %703 = vmatprep.subr.mxu0 0.0
      %704 = vmatpush1.msra.mxu0 0.0
      %705 = vmatprep.subr.mxu0 0.0
      %706 = vmatpush1.msra.mxu0 0.0
      %707 = vmatprep.subr.mxu0 0.0
      %708 = vmatpush1.msra.mxu0 0.0
      %709 = vmatprep.subr.mxu0 0.0
      %710 = vmatpush1.msra.mxu0 0.0
      %711 = vmatprep.subr.mxu0 0.0
      %712 = vmatpush1.msra.mxu0 0.0
      %713 = vmatprep.subr.mxu0 0.0
      %714 = vmatpush1.msra.mxu0 0.0
      %715 = vmatprep.subr.mxu0 0.0
      %716 = vmatpush1.msra.mxu0 0.0
      %717 = vmatprep.mubr.f32.mxu0 0.0
      %v718 = vand.u32 %v294, 4294901760
      %719 = vmatmul.mubr.f32.gmra.mrb[0].mxu0 %v718
      %v720 = vpop.f32.mrb[0].mxu0
      %v721 = vadd.f32 %v634, %v720
      %v722 = vpop.f32.mrb[0].mxu0
      %v723 = vadd.f32 %v636, %v722
      %724 = vmatprep.mubr.f32.mxu0 0.0
      %v725 = vand.u32 %v297, 4294901760
      %726 = vmatmul.mubr.f32.gmra.mrb[0].mxu0 %v725
      %v727 = vpop.f32.mrb[0].mxu0
      %v728 = vadd.f32 %v643, %v727
      %v729 = vpop.f32.mrb[0].mxu0
      %v730 = vadd.f32 %v645, %v729
      %731 = vdwg.mxu0
      %v732 = vand.u32 %v290, 4294901760
      %733 = vmatprep.subr.mxu0 %v732
      %v734 = vand.u32 %v289, 4294901760
      %735 = vmatpush1.msra.mxu0 %v734
      %736 = vmatprep.subr.mxu0 0.0
      %737 = vmatpush1.msra.mxu0 0.0
      %738 = vmatprep.subr.mxu0 0.0
      %739 = vmatpush1.msra.mxu0 0.0
      %740 = vmatprep.subr.mxu0 0.0
      %741 = vmatpush1.msra.mxu0 0.0
      %742 = vmatprep.subr.mxu0 0.0
      %743 = vmatpush1.msra.mxu0 0.0
      %744 = vmatprep.subr.mxu0 0.0
      %745 = vmatpush1.msra.mxu0 0.0
      %746 = vmatprep.subr.mxu0 0.0
      %747 = vmatpush1.msra.mxu0 0.0
      %748 = vmatprep.subr.mxu0 0.0
      %749 = vmatpush1.msra.mxu0 0.0
      %750 = vmatprep.subr.mxu0 0.0
      %751 = vmatpush1.msra.mxu0 0.0
      %752 = vmatprep.subr.mxu0 0.0
      %753 = vmatpush1.msra.mxu0 0.0
      %754 = vmatprep.subr.mxu0 0.0
      %755 = vmatpush1.msra.mxu0 0.0
      %756 = vmatprep.subr.mxu0 0.0
      %757 = vmatpush1.msra.mxu0 0.0
      %758 = vmatprep.subr.mxu0 0.0
      %759 = vmatpush1.msra.mxu0 0.0
      %760 = vmatprep.subr.mxu0 0.0
      %761 = vmatpush1.msra.mxu0 0.0
      %762 = vmatprep.subr.mxu0 0.0
      %763 = vmatpush1.msra.mxu0 0.0
      %764 = vmatprep.subr.mxu0 0.0
      %765 = vmatpush1.msra.mxu0 0.0
      %766 = vmatprep.subr.mxu0 0.0
      %767 = vmatpush1.msra.mxu0 0.0
      %768 = vmatprep.subr.mxu0 0.0
      %769 = vmatpush1.msra.mxu0 0.0
      %770 = vmatprep.subr.mxu0 0.0
      %771 = vmatpush1.msra.mxu0 0.0
      %772 = vmatprep.subr.mxu0 0.0
      %773 = vmatpush1.msra.mxu0 0.0
      %774 = vmatprep.subr.mxu0 0.0
      %775 = vmatpush1.msra.mxu0 0.0
      %776 = vmatprep.subr.mxu0 0.0
      %777 = vmatpush1.msra.mxu0 0.0
      %778 = vmatprep.subr.mxu0 0.0
      %779 = vmatpush1.msra.mxu0 0.0
      %780 = vmatprep.subr.mxu0 0.0
      %781 = vmatpush1.msra.mxu0 0.0
      %782 = vmatprep.subr.mxu0 0.0
      %783 = vmatpush1.msra.mxu0 0.0
      %784 = vmatprep.subr.mxu0 0.0
      %785 = vmatpush1.msra.mxu0 0.0
      %786 = vmatprep.subr.mxu0 0.0
      %787 = vmatpush1.msra.mxu0 0.0
      %788 = vmatprep.subr.mxu0 0.0
      %789 = vmatpush1.msra.mxu0 0.0
      %790 = vmatprep.subr.mxu0 0.0
      %791 = vmatpush1.msra.mxu0 0.0
      %792 = vmatprep.subr.mxu0 0.0
      %793 = vmatpush1.msra.mxu0 0.0
      %794 = vmatprep.subr.mxu0 0.0
      %795 = vmatpush1.msra.mxu0 0.0
      %796 = vmatprep.subr.mxu0 0.0
      %797 = vmatpush1.msra.mxu0 0.0
      %798 = vmatprep.mubr.f32.mxu0 0.0
      %v799 = vand.u32 %v294, 4294901760
      %800 = vmatmul.mubr.f32.gmra.mrb[0].mxu0 %v799
      %v801 = vpop.f32.mrb[0].mxu0
      %v802 = vadd.f32 %v721, %v801
      %v803 = vpop.f32.mrb[0].mxu0
      %v804 = vadd.f32 %v723, %v803
      %805 = vmatprep.mubr.f32.mxu0 0.0
      %v806 = vand.u32 %v297, 4294901760
      %807 = vmatmul.mubr.f32.gmra.mrb[0].mxu0 %v806
      %v808 = vpop.f32.mrb[0].mxu0
      %v809 = vadd.f32 %v728, %v808
      %v810 = vpop.f32.mrb[0].mxu0
      %v811 = vadd.f32 %v730, %v810
      %812 = vdwg.mxu0
      %v813 = vand.u32 2147483647, %v802
      %vm814 = vcmp.le.f32.partialorder %v813, 0.7853982
      %vm815 = vcmp.lt.s32.totalorder %v802, 0
      %v816 = vand.u32 %v802, 2139095040
      %v817 = vshrl.u32 %v816, 23
      %v818 = vsub.s32 %v817, 127
      %v819 = vand.u32 2147483647, %v802
      %v820 = vand.u32 %v819, 8388607
      %v821 = vor.u32 %v820, 8388608
      %v822 = vsub.s32 0, %v821
      %v823 = vadd.s32 %v818, 1
      %vm824 = vcmp.gt.s32.totalorder %v823, 0
      %v825 = vsel %vm824, %v823, 0
      %v826 = vshrl.u32 %v825, 5
      %v827 = vand.u32 %v825, 31
      %v828 = vsub.s32 32, %v827
      %v829 = vshrl.u32 683565275, %v828
      %v830 = vshll.u32 683565275, %v827
      %v831 = vshrl.u32 2475754826, %v828
      %v832 = vor.u32 %v830, %v831
      %v833 = vshll.u32 2475754826, %v827
      %v834 = vshrl.u32 2131351028, %v828
      %v835 = vor.u32 %v833, %v834
      %v836 = vshll.u32 2131351028, %v827
      %v837 = vshrl.u32 2102212464, %v828
      %v838 = vor.u32 %v836, %v837
      %v839 = vshll.u32 2102212464, %v827
      %v840 = vshrl.u32 920167782, %v828
      %v841 = vor.u32 %v839, %v840
      %v842 = vshll.u32 920167782, %v827
      %v843 = vshrl.u32 1326507024, %v828
      %v844 = vor.u32 %v842, %v843
      %vm845 = vcmp.lt.s32.totalorder %v826, 1
      %vm846 = vcmp.lt.s32.totalorder %v826, 2
      %vm847 = vcmp.lt.s32.totalorder %v826, 3
      %vm848 = vcmp.lt.s32.totalorder %v826, 4
      %v849 = vsel %vm845, %v829, %v832
      %v850 = vsel %vm848, %v838, 2102212464
      %v851 = vsel %vm847, %v835, %v850
      %v852 = vsel %vm846, %v849, %v851
      %v853 = vsel %vm845, %v832, %v835
      %v854 = vsel %vm848, %v841, 920167782
      %v855 = vsel %vm847, %v838, %v854
      %v856 = vsel %vm846, %v853, %v855
      %v857 = vsel %vm845, %v835, %v838
      %v858 = vsel %vm848, %v844, 1326507024
      %v859 = vsel %vm847, %v841, %v858
      %v860 = vsel %vm846, %v857, %v859
      %v861 = vshll.u32 %v821, 8
      %v862 = vmul.u32.u64.compose %v861, %v860
      %v863 = vextract.low.u32 %v862
      %v864 = vextract.high.u32 %v862
      %v865 = vmul.u32.u64.compose %v861, %v856
      %v866 = vextract.low.u32 %v865
      %v867 = vextract.high.u32 %v865
      %v868 = vmul.u32 %v861, %v852
      %v869 = vadd.s32 %v864, %v866
      %vm870 = vc.u32 %v864, %v866
      %v871 = vadd.s32 %v867, 1
      %v872 = vsel %vm870, %v871, %v867
      %v873 = vadd.s32 %v868, %v872
      %v874 = vadd.s32 %v873, 536870912
      %v875 = vshrl.u32 %v874, 30
      %v876 = vshll.u32 %v875, 30
      %v877 = vsub.s32 %v873, %v876
      %vm878 = vcmp.lt.s32.totalorder %v877, 0
      %v879 = vsub.s32 0, %v877
      %v880 = vsel %vm878, %v879, %v877
      %v881 = vclz %v880
      %v882 = vsub.s32 %v881, 2
      %vm883 = vcmp.gt.s32.totalorder 0, %v882
      %v884 = vsel %vm883, 0, %v882
      %v885 = vsub.s32 32, %v884
      %v886 = vshll.u32 %v877, %v884
      %v887 = vshrl.u32 %v869, %v885
      %v888 = vor.u32 %v886, %v887
      %v889 = vsub.s32 4294967266, %v884
      %v890 = vadd.s32 %v889, 127
      %v891 = vshll.u32 %v890, 23
      %v892 = vor.u32 4788187, %v891
      %v893 = vand.u32 2147483647, %v892
      %v895 = vcvt.s32.f32 %v888
      %v896 = vmul.f32 %v895, %v893
      %v897 = vxor.u32 %v896, 2147483648
      %v898 = vsel %vm815, %v897, %v896
      %v899 = vsub.s32 4, %v875
      %v900 = vsel %vm815, %v899, %v875
      %v901 = vsel %vm814, %v802, %v898
      %v902 = vsel %vm814, 0, %v900
      %v903 = vcosq.f32.pop %v901
      %v904 = vsinq.f32.pop %v901
      %vm905 = vweird.f32 %v802
      %v906 = vand.u32 %v902, 3
      %vm907 = vcmp.lt.s32.totalorder %v906, 2
      %vm908 = vcmp.eq.s32.totalorder %v906, 0
      %v909 = vxor.u32 %v904, 2147483648
      %v910 = vsel %vm908, %v903, %v909
      %vm911 = vcmp.eq.s32.totalorder %v906, 2
      %v912 = vxor.u32 %v903, 2147483648
      %v913 = vsel %vm911, %v912, %v904
      %v914 = vsel %vm907, %v910, %v913
      %v915 = vsel %vm905, nan, %v914
      %v916 = vand.u32 2147483647, %v804
      %vm917 = vcmp.le.f32.partialorder %v916, 0.7853982
      %vm918 = vcmp.lt.s32.totalorder %v804, 0
      %v919 = vand.u32 %v804, 2139095040
      %v920 = vshrl.u32 %v919, 23
      %v921 = vsub.s32 %v920, 127
      %v922 = vand.u32 2147483647, %v804
      %v923 = vand.u32 %v922, 8388607
      %v924 = vor.u32 %v923, 8388608
      %v925 = vsub.s32 0, %v924
      %v926 = vadd.s32 %v921, 1
      %vm927 = vcmp.gt.s32.totalorder %v926, 0
      %v928 = vsel %vm927, %v926, 0
      %v929 = vshrl.u32 %v928, 5
      %v930 = vand.u32 %v928, 31
      %v931 = vsub.s32 32, %v930
      %v932 = vshrl.u32 683565275, %v931
      %v933 = vshll.u32 683565275, %v930
      %v934 = vshrl.u32 2475754826, %v931
      %v935 = vor.u32 %v933, %v934
      %v936 = vshll.u32 2475754826, %v930
      %v937 = vshrl.u32 2131351028, %v931
      %v938 = vor.u32 %v936, %v937
      %v939 = vshll.u32 2131351028, %v930
      %v940 = vshrl.u32 2102212464, %v931
      %v941 = vor.u32 %v939, %v940
      %v942 = vshll.u32 2102212464, %v930
      %v943 = vshrl.u32 920167782, %v931
      %v944 = vor.u32 %v942, %v943
      %v945 = vshll.u32 920167782, %v930
      %v946 = vshrl.u32 1326507024, %v931
      %v947 = vor.u32 %v945, %v946
      %vm948 = vcmp.lt.s32.totalorder %v929, 1
      %vm949 = vcmp.lt.s32.totalorder %v929, 2
      %vm950 = vcmp.lt.s32.totalorder %v929, 3
      %vm951 = vcmp.lt.s32.totalorder %v929, 4
      %v952 = vsel %vm948, %v932, %v935
      %v953 = vsel %vm951, %v941, 2102212464
      %v954 = vsel %vm950, %v938, %v953
      %v955 = vsel %vm949, %v952, %v954
      %v956 = vsel %vm948, %v935, %v938
      %v957 = vsel %vm951, %v944, 920167782
      %v958 = vsel %vm950, %v941, %v957
      %v959 = vsel %vm949, %v956, %v958
      %v960 = vsel %vm948, %v938, %v941
      %v961 = vsel %vm951, %v947, 1326507024
      %v962 = vsel %vm950, %v944, %v961
      %v963 = vsel %vm949, %v960, %v962
      %v964 = vshll.u32 %v924, 8
      %v965 = vmul.u32.u64.compose %v964, %v963
      %v966 = vextract.low.u32 %v965
      %v967 = vextract.high.u32 %v965
      %v968 = vmul.u32.u64.compose %v964, %v959
      %v969 = vextract.low.u32 %v968
      %v970 = vextract.high.u32 %v968
      %v971 = vmul.u32 %v964, %v955
      %v972 = vadd.s32 %v967, %v969
      %vm973 = vc.u32 %v967, %v969
      %v974 = vadd.s32 %v970, 1
      %v975 = vsel %vm973, %v974, %v970
      %v976 = vadd.s32 %v971, %v975
      %v977 = vadd.s32 %v976, 536870912
      %v978 = vshrl.u32 %v977, 30
      %v979 = vshll.u32 %v978, 30
      %v980 = vsub.s32 %v976, %v979
      %vm981 = vcmp.lt.s32.totalorder %v980, 0
      %v982 = vsub.s32 0, %v980
      %v983 = vsel %vm981, %v982, %v980
      %v984 = vclz %v983
      %v985 = vsub.s32 %v984, 2
      %vm986 = vcmp.gt.s32.totalorder 0, %v985
      %v987 = vsel %vm986, 0, %v985
      %v988 = vsub.s32 32, %v987
      %v989 = vshll.u32 %v980, %v987
      %v990 = vshrl.u32 %v972, %v988
      %v991 = vor.u32 %v989, %v990
      %v992 = vsub.s32 4294967266, %v987
      %v993 = vadd.s32 %v992, 127
      %v994 = vshll.u32 %v993, 23
      %v995 = vor.u32 4788187, %v994
      %v996 = vand.u32 2147483647, %v995
      %v998 = vcvt.s32.f32 %v991
      %v999 = vmul.f32 %v998, %v996
      %v1000 = vxor.u32 %v999, 2147483648
      %v1001 = vsel %vm918, %v1000, %v999
      %v1002 = vsub.s32 4, %v978
      %v1003 = vsel %vm918, %v1002, %v978
      %v1004 = vsel %vm917, %v804, %v1001
      %v1005 = vsel %vm917, 0, %v1003
      %v1006 = vcosq.f32.pop %v1004
      %v1007 = vsinq.f32.pop %v1004
      %vm1008 = vweird.f32 %v804
      %v1009 = vand.u32 %v1005, 3
      %vm1010 = vcmp.lt.s32.totalorder %v1009, 2
      %vm1011 = vcmp.eq.s32.totalorder %v1009, 0
      %v1012 = vxor.u32 %v1007, 2147483648
      %v1013 = vsel %vm1011, %v1006, %v1012
      %vm1014 = vcmp.eq.s32.totalorder %v1009, 2
      %v1015 = vxor.u32 %v1006, 2147483648
      %v1016 = vsel %vm1014, %v1015, %v1007
      %v1017 = vsel %vm1010, %v1013, %v1016
      %v1018 = vsel %vm1008, nan, %v1017
      %v1019 = vand.u32 2147483647, %v809
      %vm1020 = vcmp.le.f32.partialorder %v1019, 0.7853982
      %vm1021 = vcmp.lt.s32.totalorder %v809, 0
      %v1022 = vand.u32 %v809, 2139095040
      %v1023 = vshrl.u32 %v1022, 23
      %v1024 = vsub.s32 %v1023, 127
      %v1025 = vand.u32 2147483647, %v809
      %v1026 = vand.u32 %v1025, 8388607
      %v1027 = vor.u32 %v1026, 8388608
      %v1028 = vsub.s32 0, %v1027
      %v1029 = vadd.s32 %v1024, 1
      %vm1030 = vcmp.gt.s32.totalorder %v1029, 0
      %v1031 = vsel %vm1030, %v1029, 0
      %v1032 = vshrl.u32 %v1031, 5
      %v1033 = vand.u32 %v1031, 31
      %v1034 = vsub.s32 32, %v1033
      %v1035 = vshrl.u32 683565275, %v1034
      %v1036 = vshll.u32 683565275, %v1033
      %v1037 = vshrl.u32 2475754826, %v1034
      %v1038 = vor.u32 %v1036, %v1037
      %v1039 = vshll.u32 2475754826, %v1033
      %v1040 = vshrl.u32 2131351028, %v1034
      %v1041 = vor.u32 %v1039, %v1040
      %v1042 = vshll.u32 2131351028, %v1033
      %v1043 = vshrl.u32 2102212464, %v1034
      %v1044 = vor.u32 %v1042, %v1043
      %v1045 = vshll.u32 2102212464, %v1033
      %v1046 = vshrl.u32 920167782, %v1034
      %v1047 = vor.u32 %v1045, %v1046
      %v1048 = vshll.u32 920167782, %v1033
      %v1049 = vshrl.u32 1326507024, %v1034
      %v1050 = vor.u32 %v1048, %v1049
      %vm1051 = vcmp.lt.s32.totalorder %v1032, 1
      %vm1052 = vcmp.lt.s32.totalorder %v1032, 2
      %vm1053 = vcmp.lt.s32.totalorder %v1032, 3
      %vm1054 = vcmp.lt.s32.totalorder %v1032, 4
      %v1055 = vsel %vm1051, %v1035, %v1038
      %v1056 = vsel %vm1054, %v1044, 2102212464
      %v1057 = vsel %vm1053, %v1041, %v1056
      %v1058 = vsel %vm1052, %v1055, %v1057
      %v1059 = vsel %vm1051, %v1038, %v1041
      %v1060 = vsel %vm1054, %v1047, 920167782
      %v1061 = vsel %vm1053, %v1044, %v1060
      %v1062 = vsel %vm1052, %v1059, %v1061
      %v1063 = vsel %vm1051, %v1041, %v1044
      %v1064 = vsel %vm1054, %v1050, 1326507024
      %v1065 = vsel %vm1053, %v1047, %v1064
      %v1066 = vsel %vm1052, %v1063, %v1065
      %v1067 = vshll.u32 %v1027, 8
      %v1068 = vmul.u32.u64.compose %v1067, %v1066
      %v1069 = vextract.low.u32 %v1068
      %v1070 = vextract.high.u32 %v1068
      %v1071 = vmul.u32.u64.compose %v1067, %v1062
      %v1072 = vextract.low.u32 %v1071
      %v1073 = vextract.high.u32 %v1071
      %v1074 = vmul.u32 %v1067, %v1058
      %v1075 = vadd.s32 %v1070, %v1072
      %vm1076 = vc.u32 %v1070, %v1072
      %v1077 = vadd.s32 %v1073, 1
      %v1078 = vsel %vm1076, %v1077, %v1073
      %v1079 = vadd.s32 %v1074, %v1078
      %v1080 = vadd.s32 %v1079, 536870912
      %v1081 = vshrl.u32 %v1080, 30
      %v1082 = vshll.u32 %v1081, 30
      %v1083 = vsub.s32 %v1079, %v1082
      %vm1084 = vcmp.lt.s32.totalorder %v1083, 0
      %v1085 = vsub.s32 0, %v1083
      %v1086 = vsel %vm1084, %v1085, %v1083
      %v1087 = vclz %v1086
      %v1088 = vsub.s32 %v1087, 2
      %vm1089 = vcmp.gt.s32.totalorder 0, %v1088
      %v1090 = vsel %vm1089, 0, %v1088
      %v1091 = vsub.s32 32, %v1090
      %v1092 = vshll.u32 %v1083, %v1090
      %v1093 = vshrl.u32 %v1075, %v1091
      %v1094 = vor.u32 %v1092, %v1093
      %v1095 = vsub.s32 4294967266, %v1090
      %v1096 = vadd.s32 %v1095, 127
      %v1097 = vshll.u32 %v1096, 23
      %v1098 = vor.u32 4788187, %v1097
      %v1099 = vand.u32 2147483647, %v1098
      %v1101 = vcvt.s32.f32 %v1094
      %v1102 = vmul.f32 %v1101, %v1099
      %v1103 = vxor.u32 %v1102, 2147483648
      %v1104 = vsel %vm1021, %v1103, %v1102
      %v1105 = vsub.s32 4, %v1081
      %v1106 = vsel %vm1021, %v1105, %v1081
      %v1107 = vsel %vm1020, %v809, %v1104
      %v1108 = vsel %vm1020, 0, %v1106
      %v1109 = vcosq.f32.pop %v1107
      %v1110 = vsinq.f32.pop %v1107
      %vm1111 = vweird.f32 %v809
      %v1112 = vand.u32 %v1108, 3
      %vm1113 = vcmp.lt.s32.totalorder %v1112, 2
      %vm1114 = vcmp.eq.s32.totalorder %v1112, 0
      %v1115 = vxor.u32 %v1110, 2147483648
      %v1116 = vsel %vm1114, %v1109, %v1115
      %vm1117 = vcmp.eq.s32.totalorder %v1112, 2
      %v1118 = vxor.u32 %v1109, 2147483648
      %v1119 = vsel %vm1117, %v1118, %v1110
      %v1120 = vsel %vm1113, %v1116, %v1119
      %v1121 = vsel %vm1111, nan, %v1120
      %v1122 = vand.u32 2147483647, %v811
      %vm1123 = vcmp.le.f32.partialorder %v1122, 0.7853982
      %vm1124 = vcmp.lt.s32.totalorder %v811, 0
      %v1125 = vand.u32 %v811, 2139095040
      %v1126 = vshrl.u32 %v1125, 23
      %v1127 = vsub.s32 %v1126, 127
      %v1128 = vand.u32 2147483647, %v811
      %v1129 = vand.u32 %v1128, 8388607
      %v1130 = vor.u32 %v1129, 8388608
      %v1131 = vsub.s32 0, %v1130
      %v1132 = vadd.s32 %v1127, 1
      %vm1133 = vcmp.gt.s32.totalorder %v1132, 0
      %v1134 = vsel %vm1133, %v1132, 0
      %v1135 = vshrl.u32 %v1134, 5
      %v1136 = vand.u32 %v1134, 31
      %v1137 = vsub.s32 32, %v1136
      %v1138 = vshrl.u32 683565275, %v1137
      %v1139 = vshll.u32 683565275, %v1136
      %v1140 = vshrl.u32 2475754826, %v1137
      %v1141 = vor.u32 %v1139, %v1140
      %v1142 = vshll.u32 2475754826, %v1136
      %v1143 = vshrl.u32 2131351028, %v1137
      %v1144 = vor.u32 %v1142, %v1143
      %v1145 = vshll.u32 2131351028, %v1136
      %v1146 = vshrl.u32 2102212464, %v1137
      %v1147 = vor.u32 %v1145, %v1146
      %v1148 = vshll.u32 2102212464, %v1136
      %v1149 = vshrl.u32 920167782, %v1137
      %v1150 = vor.u32 %v1148, %v1149
      %v1151 = vshll.u32 920167782, %v1136
      %v1152 = vshrl.u32 1326507024, %v1137
      %v1153 = vor.u32 %v1151, %v1152
      %vm1154 = vcmp.lt.s32.totalorder %v1135, 1
      %vm1155 = vcmp.lt.s32.totalorder %v1135, 2
      %vm1156 = vcmp.lt.s32.totalorder %v1135, 3
      %vm1157 = vcmp.lt.s32.totalorder %v1135, 4
      %v1158 = vsel %vm1154, %v1138, %v1141
      %v1159 = vsel %vm1157, %v1147, 2102212464
      %v1160 = vsel %vm1156, %v1144, %v1159
      %v1161 = vsel %vm1155, %v1158, %v1160
      %v1162 = vsel %vm1154, %v1141, %v1144
      %v1163 = vsel %vm1157, %v1150, 920167782
      %v1164 = vsel %vm1156, %v1147, %v1163
      %v1165 = vsel %vm1155, %v1162, %v1164
      %v1166 = vsel %vm1154, %v1144, %v1147
      %v1167 = vsel %vm1157, %v1153, 1326507024
      %v1168 = vsel %vm1156, %v1150, %v1167
      %v1169 = vsel %vm1155, %v1166, %v1168
      %v1170 = vshll.u32 %v1130, 8
      %v1171 = vmul.u32.u64.compose %v1170, %v1169
      %v1172 = vextract.low.u32 %v1171
      %v1173 = vextract.high.u32 %v1171
      %v1174 = vmul.u32.u64.compose %v1170, %v1165
      %v1175 = vextract.low.u32 %v1174
      %v1176 = vextract.high.u32 %v1174
      %v1177 = vmul.u32 %v1170, %v1161
      %v1178 = vadd.s32 %v1173, %v1175
      %vm1179 = vc.u32 %v1173, %v1175
      %v1180 = vadd.s32 %v1176, 1
      %v1181 = vsel %vm1179, %v1180, %v1176
      %v1182 = vadd.s32 %v1177, %v1181
      %v1183 = vadd.s32 %v1182, 536870912
      %v1184 = vshrl.u32 %v1183, 30
      %v1185 = vshll.u32 %v1184, 30
      %v1186 = vsub.s32 %v1182, %v1185
      %vm1187 = vcmp.lt.s32.totalorder %v1186, 0
      %v1188 = vsub.s32 0, %v1186
      %v1189 = vsel %vm1187, %v1188, %v1186
      %v1190 = vclz %v1189
      %v1191 = vsub.s32 %v1190, 2
      %vm1192 = vcmp.gt.s32.totalorder 0, %v1191
      %v1193 = vsel %vm1192, 0, %v1191
      %v1194 = vsub.s32 32, %v1193
      %v1195 = vshll.u32 %v1186, %v1193
      %v1196 = vshrl.u32 %v1178, %v1194
      %v1197 = vor.u32 %v1195, %v1196
      %v1198 = vsub.s32 4294967266, %v1193
      %v1199 = vadd.s32 %v1198, 127
      %v1200 = vshll.u32 %v1199, 23
      %v1201 = vor.u32 4788187, %v1200
      %v1202 = vand.u32 2147483647, %v1201
      %v1204 = vcvt.s32.f32 %v1197
      %v1205 = vmul.f32 %v1204, %v1202
      %v1206 = vxor.u32 %v1205, 2147483648
      %v1207 = vsel %vm1124, %v1206, %v1205
      %v1208 = vsub.s32 4, %v1184
      %v1209 = vsel %vm1124, %v1208, %v1184
      %v1210 = vsel %vm1123, %v811, %v1207
      %v1211 = vsel %vm1123, 0, %v1209
      %v1212 = vcosq.f32.pop %v1210
      %v1213 = vsinq.f32.pop %v1210
      %vm1214 = vweird.f32 %v811
      %v1215 = vand.u32 %v1211, 3
      %vm1216 = vcmp.lt.s32.totalorder %v1215, 2
      %vm1217 = vcmp.eq.s32.totalorder %v1215, 0
      %v1218 = vxor.u32 %v1213, 2147483648
      %v1219 = vsel %vm1217, %v1212, %v1218
      %vm1220 = vcmp.eq.s32.totalorder %v1215, 2
      %v1221 = vxor.u32 %v1212, 2147483648
      %v1222 = vsel %vm1220, %v1221, %v1213
      %v1223 = vsel %vm1216, %v1219, %v1222
      %v1224 = vsel %vm1214, nan, %v1223
      %v1225 = vand.u32 2147483647, %v802
      %vm1226 = vcmp.le.f32.partialorder %v1225, 0.7853982
      %vm1227 = vcmp.lt.s32.totalorder %v802, 0
      %v1228 = vand.u32 %v802, 2139095040
      %v1229 = vshrl.u32 %v1228, 23
      %v1230 = vsub.s32 %v1229, 127
      %v1231 = vand.u32 2147483647, %v802
      %v1232 = vand.u32 %v1231, 8388607
      %v1233 = vor.u32 %v1232, 8388608
      %v1234 = vsub.s32 0, %v1233
      %v1235 = vadd.s32 %v1230, 1
      %vm1236 = vcmp.gt.s32.totalorder %v1235, 0
      %v1237 = vsel %vm1236, %v1235, 0
      %v1238 = vshrl.u32 %v1237, 5
      %v1239 = vand.u32 %v1237, 31
      %v1240 = vsub.s32 32, %v1239
      %v1241 = vshrl.u32 683565275, %v1240
      %v1242 = vshll.u32 683565275, %v1239
      %v1243 = vshrl.u32 2475754826, %v1240
      %v1244 = vor.u32 %v1242, %v1243
      %v1245 = vshll.u32 2475754826, %v1239
      %v1246 = vshrl.u32 2131351028, %v1240
      %v1247 = vor.u32 %v1245, %v1246
      %v1248 = vshll.u32 2131351028, %v1239
      %v1249 = vshrl.u32 2102212464, %v1240
      %v1250 = vor.u32 %v1248, %v1249
      %v1251 = vshll.u32 2102212464, %v1239
      %v1252 = vshrl.u32 920167782, %v1240
      %v1253 = vor.u32 %v1251, %v1252
      %v1254 = vshll.u32 920167782, %v1239
      %v1255 = vshrl.u32 1326507024, %v1240
      %v1256 = vor.u32 %v1254, %v1255
      %vm1257 = vcmp.lt.s32.totalorder %v1238, 1
      %vm1258 = vcmp.lt.s32.totalorder %v1238, 2
      %vm1259 = vcmp.lt.s32.totalorder %v1238, 3
      %vm1260 = vcmp.lt.s32.totalorder %v1238, 4
      %v1261 = vsel %vm1257, %v1241, %v1244
      %v1262 = vsel %vm1260, %v1250, 2102212464
      %v1263 = vsel %vm1259, %v1247, %v1262
      %v1264 = vsel %vm1258, %v1261, %v1263
      %v1265 = vsel %vm1257, %v1244, %v1247
      %v1266 = vsel %vm1260, %v1253, 920167782
      %v1267 = vsel %vm1259, %v1250, %v1266
      %v1268 = vsel %vm1258, %v1265, %v1267
      %v1269 = vsel %vm1257, %v1247, %v1250
      %v1270 = vsel %vm1260, %v1256, 1326507024
      %v1271 = vsel %vm1259, %v1253, %v1270
      %v1272 = vsel %vm1258, %v1269, %v1271
      %v1273 = vshll.u32 %v1233, 8
      %v1274 = vmul.u32.u64.compose %v1273, %v1272
      %v1275 = vextract.low.u32 %v1274
      %v1276 = vextract.high.u32 %v1274
      %v1277 = vmul.u32.u64.compose %v1273, %v1268
      %v1278 = vextract.low.u32 %v1277
      %v1279 = vextract.high.u32 %v1277
      %v1280 = vmul.u32 %v1273, %v1264
      %v1281 = vadd.s32 %v1276, %v1278
      %vm1282 = vc.u32 %v1276, %v1278
      %v1283 = vadd.s32 %v1279, 1
      %v1284 = vsel %vm1282, %v1283, %v1279
      %v1285 = vadd.s32 %v1280, %v1284
      %v1286 = vadd.s32 %v1285, 536870912
      %v1287 = vshrl.u32 %v1286, 30
      %v1288 = vshll.u32 %v1287, 30
      %v1289 = vsub.s32 %v1285, %v1288
      %vm1290 = vcmp.lt.s32.totalorder %v1289, 0
      %v1291 = vsub.s32 0, %v1289
      %v1292 = vsel %vm1290, %v1291, %v1289
      %v1293 = vclz %v1292
      %v1294 = vsub.s32 %v1293, 2
      %vm1295 = vcmp.gt.s32.totalorder 0, %v1294
      %v1296 = vsel %vm1295, 0, %v1294
      %v1297 = vsub.s32 32, %v1296
      %v1298 = vshll.u32 %v1289, %v1296
      %v1299 = vshrl.u32 %v1281, %v1297
      %v1300 = vor.u32 %v1298, %v1299
      %v1301 = vsub.s32 4294967266, %v1296
      %v1302 = vadd.s32 %v1301, 127
      %v1303 = vshll.u32 %v1302, 23
      %v1304 = vor.u32 4788187, %v1303
      %v1305 = vand.u32 2147483647, %v1304
      %v1307 = vcvt.s32.f32 %v1300
      %v1308 = vmul.f32 %v1307, %v1305
      %v1309 = vxor.u32 %v1308, 2147483648
      %v1310 = vsel %vm1227, %v1309, %v1308
      %v1311 = vsub.s32 4, %v1287
      %v1312 = vsel %vm1227, %v1311, %v1287
      %v1313 = vsel %vm1226, %v802, %v1310
      %v1314 = vsel %vm1226, 0, %v1312
      %v1315 = vcosq.f32.pop %v1313
      %v1316 = vsinq.f32.pop %v1313
      %vm1317 = vweird.f32 %v802
      %v1318 = vadd.s32 %v1314, 3
      %v1319 = vand.u32 %v1318, 3
      %vm1320 = vcmp.lt.s32.totalorder %v1319, 2
      %vm1321 = vcmp.eq.s32.totalorder %v1319, 0
      %v1322 = vxor.u32 %v1316, 2147483648
      %v1323 = vsel %vm1321, %v1315, %v1322
      %vm1324 = vcmp.eq.s32.totalorder %v1319, 2
      %v1325 = vxor.u32 %v1315, 2147483648
      %v1326 = vsel %vm1324, %v1325, %v1316
      %v1327 = vsel %vm1320, %v1323, %v1326
      %v1328 = vsel %vm1317, nan, %v1327
      %v1329 = vand.u32 2147483647, %v804
      %vm1330 = vcmp.le.f32.partialorder %v1329, 0.7853982
      %vm1331 = vcmp.lt.s32.totalorder %v804, 0
      %v1332 = vand.u32 %v804, 2139095040
      %v1333 = vshrl.u32 %v1332, 23
      %v1334 = vsub.s32 %v1333, 127
      %v1335 = vand.u32 2147483647, %v804
      %v1336 = vand.u32 %v1335, 8388607
      %v1337 = vor.u32 %v1336, 8388608
      %v1338 = vsub.s32 0, %v1337
      %v1339 = vadd.s32 %v1334, 1
      %vm1340 = vcmp.gt.s32.totalorder %v1339, 0
      %v1341 = vsel %vm1340, %v1339, 0
      %v1342 = vshrl.u32 %v1341, 5
      %v1343 = vand.u32 %v1341, 31
      %v1344 = vsub.s32 32, %v1343
      %v1345 = vshrl.u32 683565275, %v1344
      %v1346 = vshll.u32 683565275, %v1343
      %v1347 = vshrl.u32 2475754826, %v1344
      %v1348 = vor.u32 %v1346, %v1347
      %v1349 = vshll.u32 2475754826, %v1343
      %v1350 = vshrl.u32 2131351028, %v1344
      %v1351 = vor.u32 %v1349, %v1350
      %v1352 = vshll.u32 2131351028, %v1343
      %v1353 = vshrl.u32 2102212464, %v1344
      %v1354 = vor.u32 %v1352, %v1353
      %v1355 = vshll.u32 2102212464, %v1343
      %v1356 = vshrl.u32 920167782, %v1344
      %v1357 = vor.u32 %v1355, %v1356
      %v1358 = vshll.u32 920167782, %v1343
      %v1359 = vshrl.u32 1326507024, %v1344
      %v1360 = vor.u32 %v1358, %v1359
      %vm1361 = vcmp.lt.s32.totalorder %v1342, 1
      %vm1362 = vcmp.lt.s32.totalorder %v1342, 2
      %vm1363 = vcmp.lt.s32.totalorder %v1342, 3
      %vm1364 = vcmp.lt.s32.totalorder %v1342, 4
      %v1365 = vsel %vm1361, %v1345, %v1348
      %v1366 = vsel %vm1364, %v1354, 2102212464
      %v1367 = vsel %vm1363, %v1351, %v1366
      %v1368 = vsel %vm1362, %v1365, %v1367
      %v1369 = vsel %vm1361, %v1348, %v1351
      %v1370 = vsel %vm1364, %v1357, 920167782
      %v1371 = vsel %vm1363, %v1354, %v1370
      %v1372 = vsel %vm1362, %v1369, %v1371
      %v1373 = vsel %vm1361, %v1351, %v1354
      %v1374 = vsel %vm1364, %v1360, 1326507024
      %v1375 = vsel %vm1363, %v1357, %v1374
      %v1376 = vsel %vm1362, %v1373, %v1375
      %v1377 = vshll.u32 %v1337, 8
      %v1378 = vmul.u32.u64.compose %v1377, %v1376
      %v1379 = vextract.low.u32 %v1378
      %v1380 = vextract.high.u32 %v1378
      %v1381 = vmul.u32.u64.compose %v1377, %v1372
      %v1382 = vextract.low.u32 %v1381
      %v1383 = vextract.high.u32 %v1381
      %v1384 = vmul.u32 %v1377, %v1368
      %v1385 = vadd.s32 %v1380, %v1382
      %vm1386 = vc.u32 %v1380, %v1382
      %v1387 = vadd.s32 %v1383, 1
      %v1388 = vsel %vm1386, %v1387, %v1383
      %v1389 = vadd.s32 %v1384, %v1388
      %v1390 = vadd.s32 %v1389, 536870912
      %v1391 = vshrl.u32 %v1390, 30
      %v1392 = vshll.u32 %v1391, 30
      %v1393 = vsub.s32 %v1389, %v1392
      %vm1394 = vcmp.lt.s32.totalorder %v1393, 0
      %v1395 = vsub.s32 0, %v1393
      %v1396 = vsel %vm1394, %v1395, %v1393
      %v1397 = vclz %v1396
      %v1398 = vsub.s32 %v1397, 2
      %vm1399 = vcmp.gt.s32.totalorder 0, %v1398
      %v1400 = vsel %vm1399, 0, %v1398
      %v1401 = vsub.s32 32, %v1400
      %v1402 = vshll.u32 %v1393, %v1400
      %v1403 = vshrl.u32 %v1385, %v1401
      %v1404 = vor.u32 %v1402, %v1403
      %v1405 = vsub.s32 4294967266, %v1400
      %v1406 = vadd.s32 %v1405, 127
      %v1407 = vshll.u32 %v1406, 23
      %v1408 = vor.u32 4788187, %v1407
      %v1409 = vand.u32 2147483647, %v1408
      %v1411 = vcvt.s32.f32 %v1404
      %v1412 = vmul.f32 %v1411, %v1409
      %v1413 = vxor.u32 %v1412, 2147483648
      %v1414 = vsel %vm1331, %v1413, %v1412
      %v1415 = vsub.s32 4, %v1391
      %v1416 = vsel %vm1331, %v1415, %v1391
      %v1417 = vsel %vm1330, %v804, %v1414
      %v1418 = vsel %vm1330, 0, %v1416
      %v1419 = vcosq.f32.pop %v1417
      %v1420 = vsinq.f32.pop %v1417
      %vm1421 = vweird.f32 %v804
      %v1422 = vadd.s32 %v1418, 3
      %v1423 = vand.u32 %v1422, 3
      %vm1424 = vcmp.lt.s32.totalorder %v1423, 2
      %vm1425 = vcmp.eq.s32.totalorder %v1423, 0
      %v1426 = vxor.u32 %v1420, 2147483648
      %v1427 = vsel %vm1425, %v1419, %v1426
      %vm1428 = vcmp.eq.s32.totalorder %v1423, 2
      %v1429 = vxor.u32 %v1419, 2147483648
      %v1430 = vsel %vm1428, %v1429, %v1420
      %v1431 = vsel %vm1424, %v1427, %v1430
      %v1432 = vsel %vm1421, nan, %v1431
      %v1433 = vand.u32 2147483647, %v809
      %vm1434 = vcmp.le.f32.partialorder %v1433, 0.7853982
      %vm1435 = vcmp.lt.s32.totalorder %v809, 0
      %v1436 = vand.u32 %v809, 2139095040
      %v1437 = vshrl.u32 %v1436, 23
      %v1438 = vsub.s32 %v1437, 127
      %v1439 = vand.u32 2147483647, %v809
      %v1440 = vand.u32 %v1439, 8388607
      %v1441 = vor.u32 %v1440, 8388608
      %v1442 = vsub.s32 0, %v1441
      %v1443 = vadd.s32 %v1438, 1
      %vm1444 = vcmp.gt.s32.totalorder %v1443, 0
      %v1445 = vsel %vm1444, %v1443, 0
      %v1446 = vshrl.u32 %v1445, 5
      %v1447 = vand.u32 %v1445, 31
      %v1448 = vsub.s32 32, %v1447
      %v1449 = vshrl.u32 683565275, %v1448
      %v1450 = vshll.u32 683565275, %v1447
      %v1451 = vshrl.u32 2475754826, %v1448
      %v1452 = vor.u32 %v1450, %v1451
      %v1453 = vshll.u32 2475754826, %v1447
      %v1454 = vshrl.u32 2131351028, %v1448
      %v1455 = vor.u32 %v1453, %v1454
      %v1456 = vshll.u32 2131351028, %v1447
      %v1457 = vshrl.u32 2102212464, %v1448
      %v1458 = vor.u32 %v1456, %v1457
      %v1459 = vshll.u32 2102212464, %v1447
      %v1460 = vshrl.u32 920167782, %v1448
      %v1461 = vor.u32 %v1459, %v1460
      %v1462 = vshll.u32 920167782, %v1447
      %v1463 = vshrl.u32 1326507024, %v1448
      %v1464 = vor.u32 %v1462, %v1463
      %vm1465 = vcmp.lt.s32.totalorder %v1446, 1
      %vm1466 = vcmp.lt.s32.totalorder %v1446, 2
      %vm1467 = vcmp.lt.s32.totalorder %v1446, 3
      %vm1468 = vcmp.lt.s32.totalorder %v1446, 4
      %v1469 = vsel %vm1465, %v1449, %v1452
      %v1470 = vsel %vm1468, %v1458, 2102212464
      %v1471 = vsel %vm1467, %v1455, %v1470
      %v1472 = vsel %vm1466, %v1469, %v1471
      %v1473 = vsel %vm1465, %v1452, %v1455
      %v1474 = vsel %vm1468, %v1461, 920167782
      %v1475 = vsel %vm1467, %v1458, %v1474
      %v1476 = vsel %vm1466, %v1473, %v1475
      %v1477 = vsel %vm1465, %v1455, %v1458
      %v1478 = vsel %vm1468, %v1464, 1326507024
      %v1479 = vsel %vm1467, %v1461, %v1478
      %v1480 = vsel %vm1466, %v1477, %v1479
      %v1481 = vshll.u32 %v1441, 8
      %v1482 = vmul.u32.u64.compose %v1481, %v1480
      %v1483 = vextract.low.u32 %v1482
      %v1484 = vextract.high.u32 %v1482
      %v1485 = vmul.u32.u64.compose %v1481, %v1476
      %v1486 = vextract.low.u32 %v1485
      %v1487 = vextract.high.u32 %v1485
      %v1488 = vmul.u32 %v1481, %v1472
      %v1489 = vadd.s32 %v1484, %v1486
      %vm1490 = vc.u32 %v1484, %v1486
      %v1491 = vadd.s32 %v1487, 1
      %v1492 = vsel %vm1490, %v1491, %v1487
      %v1493 = vadd.s32 %v1488, %v1492
      %v1494 = vadd.s32 %v1493, 536870912
      %v1495 = vshrl.u32 %v1494, 30
      %v1496 = vshll.u32 %v1495, 30
      %v1497 = vsub.s32 %v1493, %v1496
      %vm1498 = vcmp.lt.s32.totalorder %v1497, 0
      %v1499 = vsub.s32 0, %v1497
      %v1500 = vsel %vm1498, %v1499, %v1497
      %v1501 = vclz %v1500
      %v1502 = vsub.s32 %v1501, 2
      %vm1503 = vcmp.gt.s32.totalorder 0, %v1502
      %v1504 = vsel %vm1503, 0, %v1502
      %v1505 = vsub.s32 32, %v1504
      %v1506 = vshll.u32 %v1497, %v1504
      %v1507 = vshrl.u32 %v1489, %v1505
      %v1508 = vor.u32 %v1506, %v1507
      %v1509 = vsub.s32 4294967266, %v1504
      %v1510 = vadd.s32 %v1509, 127
      %v1511 = vshll.u32 %v1510, 23
      %v1512 = vor.u32 4788187, %v1511
      %v1513 = vand.u32 2147483647, %v1512
      %v1515 = vcvt.s32.f32 %v1508
      %v1516 = vmul.f32 %v1515, %v1513
      %v1517 = vxor.u32 %v1516, 2147483648
      %v1518 = vsel %vm1435, %v1517, %v1516
      %v1519 = vsub.s32 4, %v1495
      %v1520 = vsel %vm1435, %v1519, %v1495
      %v1521 = vsel %vm1434, %v809, %v1518
      %v1522 = vsel %vm1434, 0, %v1520
      %v1523 = vcosq.f32.pop %v1521
      %v1524 = vsinq.f32.pop %v1521
      %vm1525 = vweird.f32 %v809
      %v1526 = vadd.s32 %v1522, 3
      %v1527 = vand.u32 %v1526, 3
      %vm1528 = vcmp.lt.s32.totalorder %v1527, 2
      %vm1529 = vcmp.eq.s32.totalorder %v1527, 0
      %v1530 = vxor.u32 %v1524, 2147483648
      %v1531 = vsel %vm1529, %v1523, %v1530
      %vm1532 = vcmp.eq.s32.totalorder %v1527, 2
      %v1533 = vxor.u32 %v1523, 2147483648
      %v1534 = vsel %vm1532, %v1533, %v1524
      %v1535 = vsel %vm1528, %v1531, %v1534
      %v1536 = vsel %vm1525, nan, %v1535
      %v1537 = vand.u32 2147483647, %v811
      %vm1538 = vcmp.le.f32.partialorder %v1537, 0.7853982
      %vm1539 = vcmp.lt.s32.totalorder %v811, 0
      %v1540 = vand.u32 %v811, 2139095040
      %v1541 = vshrl.u32 %v1540, 23
      %v1542 = vsub.s32 %v1541, 127
      %v1543 = vand.u32 2147483647, %v811
      %v1544 = vand.u32 %v1543, 8388607
      %v1545 = vor.u32 %v1544, 8388608
      %v1546 = vsub.s32 0, %v1545
      %v1547 = vadd.s32 %v1542, 1
      %vm1548 = vcmp.gt.s32.totalorder %v1547, 0
      %v1549 = vsel %vm1548, %v1547, 0
      %v1550 = vshrl.u32 %v1549, 5
      %v1551 = vand.u32 %v1549, 31
      %v1552 = vsub.s32 32, %v1551
      %v1553 = vshrl.u32 683565275, %v1552
      %v1554 = vshll.u32 683565275, %v1551
      %v1555 = vshrl.u32 2475754826, %v1552
      %v1556 = vor.u32 %v1554, %v1555
      %v1557 = vshll.u32 2475754826, %v1551
      %v1558 = vshrl.u32 2131351028, %v1552
      %v1559 = vor.u32 %v1557, %v1558
      %v1560 = vshll.u32 2131351028, %v1551
      %v1561 = vshrl.u32 2102212464, %v1552
      %v1562 = vor.u32 %v1560, %v1561
      %v1563 = vshll.u32 2102212464, %v1551
      %v1564 = vshrl.u32 920167782, %v1552
      %v1565 = vor.u32 %v1563, %v1564
      %v1566 = vshll.u32 920167782, %v1551
      %v1567 = vshrl.u32 1326507024, %v1552
      %v1568 = vor.u32 %v1566, %v1567
      %vm1569 = vcmp.lt.s32.totalorder %v1550, 1
      %vm1570 = vcmp.lt.s32.totalorder %v1550, 2
      %vm1571 = vcmp.lt.s32.totalorder %v1550, 3
      %vm1572 = vcmp.lt.s32.totalorder %v1550, 4
      %v1573 = vsel %vm1569, %v1553, %v1556
      %v1574 = vsel %vm1572, %v1562, 2102212464
      %v1575 = vsel %vm1571, %v1559, %v1574
      %v1576 = vsel %vm1570, %v1573, %v1575
      %v1577 = vsel %vm1569, %v1556, %v1559
      %v1578 = vsel %vm1572, %v1565, 920167782
      %v1579 = vsel %vm1571, %v1562, %v1578
      %v1580 = vsel %vm1570, %v1577, %v1579
      %v1581 = vsel %vm1569, %v1559, %v1562
      %v1582 = vsel %vm1572, %v1568, 1326507024
      %v1583 = vsel %vm1571, %v1565, %v1582
      %v1584 = vsel %vm1570, %v1581, %v1583
      %v1585 = vshll.u32 %v1545, 8
      %v1586 = vmul.u32.u64.compose %v1585, %v1584
      %v1587 = vextract.low.u32 %v1586
      %v1588 = vextract.high.u32 %v1586
      %v1589 = vmul.u32.u64.compose %v1585, %v1580
      %v1590 = vextract.low.u32 %v1589
      %v1591 = vextract.high.u32 %v1589
      %v1592 = vmul.u32 %v1585, %v1576
      %v1593 = vadd.s32 %v1588, %v1590
      %vm1594 = vc.u32 %v1588, %v1590
      %v1595 = vadd.s32 %v1591, 1
      %v1596 = vsel %vm1594, %v1595, %v1591
      %v1597 = vadd.s32 %v1592, %v1596
      %v1598 = vadd.s32 %v1597, 536870912
      %v1599 = vshrl.u32 %v1598, 30
      %v1600 = vshll.u32 %v1599, 30
      %v1601 = vsub.s32 %v1597, %v1600
      %vm1602 = vcmp.lt.s32.totalorder %v1601, 0
      %v1603 = vsub.s32 0, %v1601
      %v1604 = vsel %vm1602, %v1603, %v1601
      %v1605 = vclz %v1604
      %v1606 = vsub.s32 %v1605, 2
      %vm1607 = vcmp.gt.s32.totalorder 0, %v1606
      %v1608 = vsel %vm1607, 0, %v1606
      %v1609 = vsub.s32 32, %v1608
      %v1610 = vshll.u32 %v1601, %v1608
      %v1611 = vshrl.u32 %v1593, %v1609
      %v1612 = vor.u32 %v1610, %v1611
      %v1613 = vsub.s32 4294967266, %v1608
      %v1614 = vadd.s32 %v1613, 127
      %v1615 = vshll.u32 %v1614, 23
      %v1616 = vor.u32 4788187, %v1615
      %v1617 = vand.u32 2147483647, %v1616
      %v1619 = vcvt.s32.f32 %v1612
      %v1620 = vmul.f32 %v1619, %v1617
      %v1621 = vxor.u32 %v1620, 2147483648
      %v1622 = vsel %vm1539, %v1621, %v1620
      %v1623 = vsub.s32 4, %v1599
      %v1624 = vsel %vm1539, %v1623, %v1599
      %v1625 = vsel %vm1538, %v811, %v1622
      %v1626 = vsel %vm1538, 0, %v1624
      %v1627 = vcosq.f32.pop %v1625
      %v1628 = vsinq.f32.pop %v1625
      %vm1629 = vweird.f32 %v811
      %v1630 = vadd.s32 %v1626, 3
      %v1631 = vand.u32 %v1630, 3
      %vm1632 = vcmp.lt.s32.totalorder %v1631, 2
      %vm1633 = vcmp.eq.s32.totalorder %v1631, 0
      %v1634 = vxor.u32 %v1628, 2147483648
      %v1635 = vsel %vm1633, %v1627, %v1634
      %vm1636 = vcmp.eq.s32.totalorder %v1631, 2
      %v1637 = vxor.u32 %v1627, 2147483648
      %v1638 = vsel %vm1636, %v1637, %v1628
      %v1639 = vsel %vm1632, %v1635, %v1638
      %v1640 = vsel %vm1629, nan, %v1639
      %vm1641 = vcmask 130048
      %v1643 = vsel %vm1641, %v288, 0
      %1645 = vmatprep.subr.mxu0 %v1018
      %1646 = vmatpush1.msra.mxu0 %v915
      %1647 = vmatprep.subr.mxu0 %v1224
      %1648 = vmatpush1.msra.mxu0 %v1121
      %1649 = vmatprep.subr.mxu0 0.0
      %1650 = vmatpush1.msra.mxu0 0.0
      %1651 = vmatprep.subr.mxu0 0.0
      %1652 = vmatpush1.msra.mxu0 0.0
      %1653 = vmatprep.subr.mxu0 0.0
      %1654 = vmatpush1.msra.mxu0 0.0
      %1655 = vmatprep.subr.mxu0 0.0
      %1656 = vmatpush1.msra.mxu0 0.0
      %1657 = vmatprep.subr.mxu0 0.0
      %1658 = vmatpush1.msra.mxu0 0.0
      %1659 = vmatprep.subr.mxu0 0.0
      %1660 = vmatpush1.msra.mxu0 0.0
      %1661 = vmatprep.subr.mxu0 0.0
      %1662 = vmatpush1.msra.mxu0 0.0
      %1663 = vmatprep.subr.mxu0 0.0
      %1664 = vmatpush1.msra.mxu0 0.0
      %1665 = vmatprep.subr.mxu0 0.0
      %1666 = vmatpush1.msra.mxu0 0.0
      %1667 = vmatprep.subr.mxu0 0.0
      %1668 = vmatpush1.msra.mxu0 0.0
      %1669 = vmatprep.subr.mxu0 0.0
      %1670 = vmatpush1.msra.mxu0 0.0
      %1671 = vmatprep.subr.mxu0 0.0
      %1672 = vmatpush1.msra.mxu0 0.0
      %1673 = vmatprep.subr.mxu0 0.0
      %1674 = vmatpush1.msra.mxu0 0.0
      %1675 = vmatprep.subr.mxu0 0.0
      %1676 = vmatpush1.msra.mxu0 0.0
      %1677 = vmatprep.subr.mxu0 0.0
      %1678 = vmatpush1.msra.mxu0 0.0
      %1679 = vmatprep.subr.mxu0 0.0
      %1680 = vmatpush1.msra.mxu0 0.0
      %1681 = vmatprep.subr.mxu0 0.0
      %1682 = vmatpush1.msra.mxu0 0.0
      %1683 = vmatprep.subr.mxu0 0.0
      %1684 = vmatpush1.msra.mxu0 0.0
      %1685 = vmatprep.subr.mxu0 0.0
      %1686 = vmatpush1.msra.mxu0 0.0
      %1687 = vmatprep.subr.mxu0 0.0
      %1688 = vmatpush1.msra.mxu0 0.0
      %1689 = vmatprep.subr.mxu0 0.0
      %1690 = vmatpush1.msra.mxu0 0.0
      %1691 = vmatprep.subr.mxu0 0.0
      %1692 = vmatpush1.msra.mxu0 0.0
      %1693 = vmatprep.subr.mxu0 0.0
      %1694 = vmatpush1.msra.mxu0 0.0
      %1695 = vmatprep.subr.mxu0 0.0
      %1696 = vmatpush1.msra.mxu0 0.0
      %1697 = vmatprep.subr.mxu0 0.0
      %1698 = vmatpush1.msra.mxu0 0.0
      %1699 = vmatprep.subr.mxu0 0.0
      %1700 = vmatpush1.msra.mxu0 0.0
      %1701 = vmatprep.subr.mxu0 0.0
      %1702 = vmatpush1.msra.mxu0 0.0
      %1703 = vmatprep.subr.mxu0 0.0
      %1704 = vmatpush1.msra.mxu0 0.0
      %1705 = vmatprep.subr.mxu0 0.0
      %1706 = vmatpush1.msra.mxu0 0.0
      %1707 = vmatprep.subr.mxu0 0.0
      %1708 = vmatpush1.msra.mxu0 0.0
      %1709 = vmatprep.mubr.f32.mxu0 0.0
      %1710 = vmatmul.mubr.f32.gmra.mrb[0].mxu0 %v1643
      %v1711 = vpop.f32.mrb[0].mxu0
      %v1712 = vadd.f32 0.0, %v1711
      %v1713 = vpop.f32.mrb[0].mxu0
      %v1714 = vadd.f32 0.0, %v1713
      %1715 = vdwg.mxu0
      %1716 = vmatprep.subr.mxu0 %v1432
      %1717 = vmatpush1.msra.mxu0 %v1328
      %1718 = vmatprep.subr.mxu0 %v1640
      %1719 = vmatpush1.msra.mxu0 %v1536
      %1720 = vmatprep.subr.mxu0 0.0
      %1721 = vmatpush1.msra.mxu0 0.0
      %1722 = vmatprep.subr.mxu0 0.0
      %1723 = vmatpush1.msra.mxu0 0.0
      %1724 = vmatprep.subr.mxu0 0.0
      %1725 = vmatpush1.msra.mxu0 0.0
      %1726 = vmatprep.subr.mxu0 0.0
      %1727 = vmatpush1.msra.mxu0 0.0
      %1728 = vmatprep.subr.mxu0 0.0
      %1729 = vmatpush1.msra.mxu0 0.0
      %1730 = vmatprep.subr.mxu0 0.0
      %1731 = vmatpush1.msra.mxu0 0.0
      %1732 = vmatprep.subr.mxu0 0.0
      %1733 = vmatpush1.msra.mxu0 0.0
      %1734 = vmatprep.subr.mxu0 0.0
      %1735 = vmatpush1.msra.mxu0 0.0
      %1736 = vmatprep.subr.mxu0 0.0
      %1737 = vmatpush1.msra.mxu0 0.0
      %1738 = vmatprep.subr.mxu0 0.0
      %1739 = vmatpush1.msra.mxu0 0.0
      %1740 = vmatprep.subr.mxu0 0.0
      %1741 = vmatpush1.msra.mxu0 0.0
      %1742 = vmatprep.subr.mxu0 0.0
      %1743 = vmatpush1.msra.mxu0 0.0
      %1744 = vmatprep.subr.mxu0 0.0
      %1745 = vmatpush1.msra.mxu0 0.0
      %1746 = vmatprep.subr.mxu0 0.0
      %1747 = vmatpush1.msra.mxu0 0.0
      %1748 = vmatprep.subr.mxu0 0.0
      %1749 = vmatpush1.msra.mxu0 0.0
      %1750 = vmatprep.subr.mxu0 0.0
      %1751 = vmatpush1.msra.mxu0 0.0
      %1752 = vmatprep.subr.mxu0 0.0
      %1753 = vmatpush1.msra.mxu0 0.0
      %1754 = vmatprep.subr.mxu0 0.0
      %1755 = vmatpush1.msra.mxu0 0.0
      %1756 = vmatprep.subr.mxu0 0.0
      %1757 = vmatpush1.msra.mxu0 0.0
      %1758 = vmatprep.subr.mxu0 0.0
      %1759 = vmatpush1.msra.mxu0 0.0
      %1760 = vmatprep.subr.mxu0 0.0
      %1761 = vmatpush1.msra.mxu0 0.0
      %1762 = vmatprep.subr.mxu0 0.0
      %1763 = vmatpush1.msra.mxu0 0.0
      %1764 = vmatprep.subr.mxu0 0.0
      %1765 = vmatpush1.msra.mxu0 0.0
      %1766 = vmatprep.subr.mxu0 0.0
      %1767 = vmatpush1.msra.mxu0 0.0
      %1768 = vmatprep.subr.mxu0 0.0
      %1769 = vmatpush1.msra.mxu0 0.0
      %1770 = vmatprep.subr.mxu0 0.0
      %1771 = vmatpush1.msra.mxu0 0.0
      %1772 = vmatprep.subr.mxu0 0.0
      %1773 = vmatpush1.msra.mxu0 0.0
      %1774 = vmatprep.subr.mxu0 0.0
      %1775 = vmatpush1.msra.mxu0 0.0
      %1776 = vmatprep.subr.mxu0 0.0
      %1777 = vmatpush1.msra.mxu0 0.0
      %1778 = vmatprep.subr.mxu0 0.0
      %1779 = vmatpush1.msra.mxu0 0.0
      %1780 = vmatprep.mubr.f32.mxu0 0.0
      %1781 = vmatmul.mubr.f32.gmra.mrb[0].mxu0 %v1643
      %v1782 = vpop.f32.mrb[0].mxu0
      %v1783 = vadd.f32 0.0, %v1782
      %v1784 = vpop.f32.mrb[0].mxu0
      %v1785 = vadd.f32 0.0, %v1784
      %1786 = vdwg.mxu0
      %v1787 = vld [vmem:[%s279] sm:$0xf]
      %v1788 = vmul.f32 %v1712, %v1712
      %v1789 = vmul.f32 %v1714, %v1714
      %v1790 = vmul.f32 %v1783, %v1783
      %v1791 = vmul.f32 %v1785, %v1785
      %v1792 = vadd.f32 %v1788, %v1790
      %v1793 = vadd.f32 %v1789, %v1791
      %v1795 = vlaneseq
      %v1796 = vshrl.u32 %v1795, 7
      %v1797 = vsub.s32 0, %v1796
      %v1798 = vrot.slane %v291, %v1797
      %v1799 = vlaneseq
      %v1800 = vshrl.u32 %v1799, 7
      %v1801 = vsub.s32 1, %v1800
      %v1802 = vrot.slane %v291, %v1801
      %v1805 = vmul.f32 %v1798, %v1792
      %v1806 = vmul.f32 %v1802, %v1793
      %vm1807 = vcmask 1043456
      %v1808 = vsel %vm1807, %v1805, 0.0
      %v1809 = vsel %vm1807, %v1806, 0.0
      %v1810 = vadd.f32 %v1808, %v1809
      %1811 = vadd.xlane.f32.xlu0 %v1810
      %v1812 = vpop.xlane.xlu0 %1811
      %v1813 = vadd.f32 %v1787, %v1812
      %vm1814 = vcmask 3072
      %1815 = vst.msk [vmem:[%s279] sm:$0xf] %vm1814, %v1813
      %p1816 = scmp.lt.s32.totalorder %s19, 1
      %s1817 = scalar_select %p1816, %s19, 1
      %s1818 = smul.addr %s1817, 4
      %s1819 = scalar_lea.vmem %s4, %s1818
      // Predicated region
      $region41: #{tpu_custom_call.1} parent=35 // pred_check
        %p1820 = pneg %p151
      $region42: #{tpu_custom_call.1} parent=35 // pred_check_branch
        %1822 = sbr.rel (%p1820) target = $region44
      $region43: #{tpu_custom_call.1} parent=35 // pred_region
        _
      $region44: #{tpu_custom_call.1} parent=35 // pred_fallthru
        _
    $region36: #{tpu_custom_call.1} parent=5 // pred_fallthru
      _
    %p1823 = scmp.le.s32.totalorder 2, %s10
    // Predicated region
    $region45: #{tpu_custom_call.1} parent=5 // pred_check
      %p1824 = pneg %p1823
    $region46: #{tpu_custom_call.1} parent=5 // pred_check_branch
      %1826 = sbr.rel (%p1824) target = $region48
    $region47: #{tpu_custom_call.1} parent=5 // pred_region
      %s1827 = ssub.s32 %s10, 2
      // Predicated region
      $region49: #{tpu_custom_call.1} parent=47 // pred_check
        %p1828 = pneg %p157
      $region50: #{tpu_custom_call.1} parent=47 // pred_check_branch
        %1830 = sbr.rel (%p1828) target = $region52
      $region51: #{tpu_custom_call.1} parent=47 // pred_region
        %p1831 = scmp.lt.s32.totalorder %s21, 1
        %s1832 = scalar_select %p1831, %s21, 1
        %s1833 = smul.addr %s1832, 4
        %s1834 = scalar_lea.vmem %s4, %s1833
      $region52: #{tpu_custom_call.1} parent=47 // pred_fallthru
        _
    $region48: #{tpu_custom_call.1} parent=5 // pred_fallthru
      _
  $region6: #{tpu_custom_call.1} parent=0 // loop_footer
    %s14 = sadd.s32 1, %s10
  $region7: #{tpu_custom_call.1} parent=0 // loop_footer_branch
    %9 = sbr.rel target = $region3
  $region8: #{tpu_custom_call.1} parent=0 // loop_exit
    _

</llo_original>
